<compile_context>
chip_gen: v6e
topology: v6e:2x2x1
jax: 0.10.0
libtpu: 0.0.40
codegen_flags: <defaults>
</compile_context>

<pallas_src>
import functools

import jax
import jax.numpy as jnp
import numpy as np
from jax.experimental import pallas as pl
from jax.experimental.pallas import tpu as pltpu

_MIB = 1024 * 1024


def _round_up(x, m):
    return ((x + m - 1) // m) * m


# ----------------------------- Pallas kernel ------------------------------- #
def _transition_down_kernel(feats_ref, gb_ref, w_ref, out_ref, *, c_real):
    # feats_ref : (K, GB, Cp)  k-major grouped neighbors, channels zero-padded
    # gb_ref    : (2, Cp)      row 0 = LayerNorm gamma, row 1 = beta (padding = 0)
    # w_ref     : (Cp, OCp)    Linear weight, pre-transposed, zero-padded, bf16
    # out_ref   : (GB, OCp)    max over the K neighbors
    k = feats_ref.shape[0]
    c_pad = feats_ref.shape[2]
    pad_lanes = c_pad - c_real

    gamma = gb_ref[0:1, :]                       # (1, Cp)
    beta = gb_ref[1:2, :]                        # (1, Cp)
    w = w_ref[...]                               # (Cp, OCp) bf16, resident

    inv_c = jnp.float32(1.0 / c_real)
    eps = jnp.float32(1e-5)

    acc = None
    # Static unroll over the small k axis: per-slice LayerNorm + MXU matmul,
    # folded into the running max (pure VPU elementwise, no XLU reduce).
    for j in range(k):
        x = feats_ref[j].astype(jnp.float32)     # (GB, Cp); padded lanes are 0
        mean = jnp.sum(x, axis=-1, keepdims=True) * inv_c
        xc = x - mean
        ssq = jnp.sum(xc * xc, axis=-1, keepdims=True)
        if pad_lanes > 0:
            # Padded lanes of xc equal -mean; remove their contribution exactly.
            ssq = jnp.maximum(ssq - jnp.float32(pad_lanes) * (mean * mean), 0.0)
        var = ssq * inv_c
        # gamma/beta padding is zero -> padded lanes of xn become exactly 0,
        # and padded weight rows are zero, so padding adds nothing to the matmul.
        xn = (xc * jax.lax.rsqrt(var + eps)) * gamma + beta
        y = jnp.dot(xn.astype(jnp.bfloat16), w,
                    preferred_element_type=jnp.float32)          # (GB, OCp)
        acc = y if acc is None else jnp.maximum(acc, y)

    out_ref[...] = acc.astype(out_ref.dtype)


def _run_pallas(feats_km, gamma_beta, w_t, *, gb, c_real, oc_pad, out_dtype,
                vmem_limit, cost, single_buffer_invariants):
    k, m_pad, c_pad = feats_km.shape

    def const_spec(shape):
        index_map = lambda i: (0,) * len(shape)
        if single_buffer_invariants:
            return pl.BlockSpec(shape, index_map, pipeline_mode=pl.Buffered(1))
        return pl.BlockSpec(shape, index_map)

    kernel = functools.partial(_transition_down_kernel, c_real=c_real)

    return pl.pallas_call(
        kernel,
        out_shape=jax.ShapeDtypeStruct((m_pad, oc_pad), out_dtype),
        grid_spec=pltpu.PrefetchScalarGridSpec(
            num_scalar_prefetch=0,
            grid=(m_pad // gb,),
            in_specs=[
                pl.BlockSpec((k, gb, c_pad), lambda i: (0, i, 0)),
                const_spec((2, c_pad)),          # gamma/beta (loop-invariant)
                const_spec((c_pad, oc_pad)),     # weight     (loop-invariant)
            ],
            out_specs=pl.BlockSpec((gb, oc_pad), lambda i: (i, 0)),
        ),
        compiler_params=pltpu.CompilerParams(
            dimension_semantics=("parallel",),
            vmem_limit_bytes=int(vmem_limit),
        ),
        cost_estimate=cost,
    )(feats_km, gamma_beta, w_t)


def transition_down_core(grouped_km, c_real, gamma, beta, weight, *,
                         group_block=512, out_dtype=None):
    """grouped_km: (k, m, c_pad) k-major, channels already zero-padded to 128*.
    gamma/beta: (c_real,); weight: (out_c, c_real)."""
    k, m, c_pad = grouped_km.shape
    oc = weight.shape[0]
    oc_pad = _round_up(oc, 128)
    out_dtype = grouped_km.dtype if out_dtype is None else jnp.dtype(out_dtype)
    in_bytes = np.dtype(grouped_km.dtype).itemsize
    out_bytes = np.dtype(out_dtype).itemsize

    # --- generation-aware VMEM sizing ------------------------------------- #
    vmem_cap = 64 * _MIB
    try:
        vmem_cap = int(pltpu.get_tpu_info().vmem_capacity_bytes)
    except Exception:
        pass
    try:
        if "v7" in jax.devices()[0].device_kind.lower():
            vmem_cap = min(vmem_cap, 64 * _MIB)   # 64 MiB per TensorCore on v7x
    except Exception:
        pass
    if vmem_cap <= 64 * _MIB:                     # v7x-class
        budget, vmem_limit = 40 * _MIB, 54 * _MIB
    else:                                         # v5e / v6e (128 MiB)
        budget, vmem_limit = 96 * _MIB, 104 * _MIB
    vmem_limit = min(vmem_limit, vmem_cap)

    def step_bytes(g):
        return (2 * k * g * c_pad * in_bytes          # double-buffered input block
                + 2 * g * oc_pad * out_bytes          # double-buffered output block
                + 2 * c_pad * oc_pad * 2              # bf16 weight (counted x2)
                + 2 * 2 * c_pad * 4                   # gamma/beta
                + g * (16 * c_pad + 8 * oc_pad))      # f32 x/xc/xn + bf16 xn + y + acc

    m_ceil = _round_up(max(m, 1), 8)
    gb = max(8, min(_round_up(group_block, 8), m_ceil))
    # Keep >= ~4 grid steps when m allows it (v7x has 2 TensorCores per chip).
    gb = min(gb, max(8, _round_up(-(-m_ceil // 4), 8)))
    while gb > 8 and step_bytes(gb) > budget:
        gb = max(8, _round_up(gb // 2, 8))

    m_pad = _round_up(m, gb)
    feats_km = jnp.pad(grouped_km, ((0, 0), (0, m_pad - m), (0, 0)))

    gamma_beta = jnp.pad(jnp.stack([gamma, beta]).astype(jnp.float32),
                         ((0, 0), (0, c_pad - c_real)))                  # (2, Cp)
    w_t = jnp.pad(weight.T.astype(jnp.float32),
                  ((0, c_pad - c_real), (0, oc_pad - oc))).astype(jnp.bfloat16)

    try:
        cost = pl.CostEstimate(
            flops=2 * m_pad * k * c_pad * oc_pad,
            transcendentals=m_pad * k,
            bytes_accessed=(k * m_pad * c_pad * in_bytes
                            + c_pad * oc_pad * 2 + 2 * c_pad * 4
                            + m_pad * oc_pad * out_bytes))
    except Exception:
        cost = None

    run = functools.partial(_run_pallas, feats_km, gamma_beta, w_t,
                            gb=gb, c_real=c_real, oc_pad=oc_pad,
                            out_dtype=out_dtype, vmem_limit=vmem_limit, cost=cost)
    try:
        out = run(single_buffer_invariants=True)
    except Exception:
        # Fallback if this JAX build rejects pipeline_mode=pl.Buffered(1).
        out = run(single_buffer_invariants=False)

    return out[:m, :oc]


# ------------------------------ JAX glue ----------------------------------- #
def _fps_segment(xyz_seg, n_sample):
    """Furthest point sampling on one batch segment, seeded at index 0 (on device)."""
    n = xyz_seg.shape[0]

    def body(i, carry):
        dist, idx, cur = carry
        d = jnp.sum((xyz_seg - xyz_seg[cur]) ** 2, axis=-1)
        dist = jnp.minimum(dist, d)
        cur = jnp.argmax(dist).astype(jnp.int32)
        idx = idx.at[i].set(cur)
        return dist, idx, cur

    dist0 = jnp.full((n,), jnp.inf, dtype=jnp.float32)
    idx0 = jnp.zeros((n_sample,), dtype=jnp.int32)
    _, idx, _ = jax.lax.fori_loop(1, n_sample, body, (dist0, idx0, jnp.int32(0)))
    return idx


def transition_down_forward(feats, xyz, offset, params, *, ratio, k):
    """Mirrors TransitionDown.forward. offset: cumulative point counts per batch."""
    offset_np = np.asarray(offset)
    n, c = feats.shape
    c_pad = _round_up(c, 128)

    # n_offset / count computation (exactly as in the PyTorch module).
    count = int(offset_np[0] * ratio) + 1
    n_offset = [count]
    for i in range(1, offset_np.shape[0]):
        count += (offset_np[i] - offset_np[i - 1]) * ratio + 1
        n_offset.append(int(count))
    n_offset_np = np.asarray(n_offset, dtype=np.int32)

    # Pad channel lanes ONCE on the per-point features, before grouping: the
    # grouped tensor is ratio*k times larger, padding it later costs an extra
    # HBM pass over the largest array feeding the kernel.
    feats_pad = jnp.pad(feats, ((0, 0), (0, c_pad - c)))

    # Per-segment furthest point sampling + kNN grouping (use_xyz=False),
    # gathered k-major so the kernel block is (k, gb, c_pad).
    grouped_km_list, n_xyz_list = [], []
    prev, nprev = 0, 0
    for b in range(offset_np.shape[0]):
        end, nend = int(offset_np[b]), int(n_offset_np[b])
        xyz_seg = xyz[prev:end]
        feats_seg = feats_pad[prev:end]
        idx_seg = _fps_segment(xyz_seg, nend - nprev)
        new_xyz_seg = xyz_seg[idx_seg]
        d = jnp.sum((new_xyz_seg[:, None, :] - xyz_seg[None, :, :]) ** 2, axis=-1)
        _, nn_idx = jax.lax.top_k(-d, k)                  # (m_seg, k) nearest
        grouped_km_list.append(feats_seg[nn_idx.T])       # (k, m_seg, c_pad)
        n_xyz_list.append(new_xyz_seg)
        prev, nprev = end, nend

    grouped_km = jnp.concatenate(grouped_km_list, axis=1)  # (k, m, c_pad)
    n_xyz = jnp.concatenate(n_xyz_list, axis=0)            # (m, 3)

    # Hot path: LayerNorm -> Linear(no bias) -> max over k, in Pallas.
    out = transition_down_core(grouped_km, c, params["ln_gamma"],
                               params["ln_beta"], params["lin_w"])
    return out, n_xyz, jnp.asarray(n_offset_np), grouped_km


# ------------------------------ references --------------------------------- #
def _reference_f32(grouped_feats, gamma, beta, weight):
    x = grouped_feats.astype(jnp.float32)
    mean = jnp.mean(x, axis=-1, keepdims=True)
    var = jnp.mean((x - mean) ** 2, axis=-1, keepdims=True)
    xn = (x - mean) / jnp.sqrt(var + 1e-5) * gamma + beta
    y = jnp.einsum("mkc,oc->mko", xn, weight)
    return jnp.max(y, axis=1)


def _reference_bf16(grouped_feats, gamma, beta, weight):
    # Same math, matmul operands rounded to bf16 (f32 accumulation) to match the
    # kernel's intentional MXU precision choice.
    x = grouped_feats.astype(jnp.float32)
    mean = jnp.mean(x, axis=-1, keepdims=True)
    var = jnp.mean((x - mean) ** 2, axis=-1, keepdims=True)
    xn = (x - mean) / jnp.sqrt(var + 1e-5) * gamma + beta
    y = jnp.einsum("mkc,oc->mko", xn.astype(jnp.bfloat16),
                   weight.astype(jnp.bfloat16),
                   preferred_element_type=jnp.float32)
    return jnp.max(y, axis=1)


# --------------------------------- main ------------------------------------ #
if __name__ == "__main__":
    key = jax.random.PRNGKey(0)
    k1, k2, k3, k4, k5 = jax.random.split(key, 5)

    # Small synthetic point cloud: 2 batch segments of 16 points each.
    in_channels, out_channels, ratio, knn_k = 16, 32, 0.25, 4
    offset = np.array([16, 32], dtype=np.int32)
    n_total = int(offset[-1])

    xyz = jax.random.normal(k1, (n_total, 3), dtype=jnp.float32)
    feats = jax.random.normal(k2, (n_total, in_channels), dtype=jnp.float32)

    # Deterministic parameters (synthetic, not a checkpoint).
    params = {
        "ln_gamma": 1.0 + 0.05 * jax.random.normal(k3, (in_channels,), jnp.float32),
        "ln_beta": 0.05 * jax.random.normal(k4, (in_channels,), jnp.float32),
        "lin_w": jax.random.normal(k5, (out_channels, in_channels), jnp.float32)
                 / np.sqrt(in_channels),
    }

    out, n_xyz, n_offset, grouped_km = transition_down_forward(
        feats, xyz, offset, params, ratio=ratio, k=knn_k)
    out = jax.block_until_ready(out)

    assert out.shape == (int(n_offset[-1]), out_channels), out.shape
    assert n_xyz.shape == (int(n_offset[-1]), 3), n_xyz.shape

    # (m, k, c) view of the grouped features for the references.
    grouped = jnp.transpose(grouped_km, (1, 0, 2))[:, :, :in_channels]

    # Structural check vs. a reference with the same bf16 matmul rounding.
    ref_bf16 = _reference_bf16(grouped, params["ln_gamma"], params["ln_beta"],
                               params["lin_w"])
    np.testing.assert_allclose(np.asarray(out), np.asarray(ref_bf16),
                               rtol=2e-3, atol=2e-3)

    # Accuracy check vs. the pure-f32 PyTorch-equivalent math (bf16-tolerant).
    ref_f32 = _reference_f32(grouped, params["ln_gamma"], params["ln_beta"],
                             params["lin_w"])
    np.testing.assert_allclose(np.asarray(out), np.asarray(ref_f32),
                               rtol=5e-2, atol=5e-2)

    print("KERNEL_OK")
</pallas_src>

<mosaic_0001>
module attributes {stable_mosaic.version = 11 : i64} {
  func.func @_transition_down_kernel(%arg0: i32, %arg1: memref<4x8x128xf32, #tpu.memory_space<vmem>>, %arg2: memref<2x128xf32, #tpu.memory_space<vmem>>, %arg3: memref<128x128xbf16, #tpu.memory_space<vmem>>, %arg4: memref<8x128xf32, #tpu.memory_space<vmem>>) attributes {dimension_semantics = [#tpu.dimension_semantics<parallel>], iteration_bounds = array<i64: 2>, scalar_prefetch = 0 : i64, scratch_operands = 0 : i64, tpu.core_type = #tpu.core_type<tc>, window_params = [{transform_indices = @transform_0, window_bounds = array<i64: 4, 8, 128>}, {pipeline_mode = #tpu.pipeline_mode<synchronous>, transform_indices = @transform_1, window_bounds = array<i64: 2, 128>}, {pipeline_mode = #tpu.pipeline_mode<synchronous>, transform_indices = @transform_2, window_bounds = array<i64: 128, 128>}, {transform_indices = @transform_3, window_bounds = array<i64: 8, 128>}]} {
    %c0 = arith.constant 0 : index
    %c0_0 = arith.constant 0 : index
    %0 = vector.load %arg2[%c0, %c0_0] : memref<2x128xf32, #tpu.memory_space<vmem>>, vector<1x128xf32>
    %c1 = arith.constant 1 : index
    %c0_1 = arith.constant 0 : index
    %1 = vector.load %arg2[%c1, %c0_1] : memref<2x128xf32, #tpu.memory_space<vmem>>, vector<1x128xf32>
    %c0_2 = arith.constant 0 : index
    %c0_3 = arith.constant 0 : index
    %2 = vector.load %arg3[%c0_2, %c0_3] : memref<128x128xbf16, #tpu.memory_space<vmem>>, vector<128x128xbf16>
    %c0_4 = arith.constant 0 : index
    %c0_5 = arith.constant 0 : index
    %c0_6 = arith.constant 0 : index
    %3 = vector.load %arg1[%c0_4, %c0_5, %c0_6] : memref<4x8x128xf32, #tpu.memory_space<vmem>>, vector<1x8x128xf32>
    %4 = vector.shape_cast %3 : vector<1x8x128xf32> to vector<8x128xf32>
    %cst = arith.constant dense<0.000000e+00> : vector<8xf32>
    %5 = vector.multi_reduction <add>, %4, %cst [1] : vector<8x128xf32> to vector<8xf32>
    %6 = vector.shape_cast %5 : vector<8xf32> to vector<8x1xf32>
    %cst_7 = arith.constant 6.250000e-02 : f32
    %7 = vector.broadcast %cst_7 : f32 to vector<8x1xf32>
    %8 = arith.mulf %6, %7 : vector<8x1xf32>
    %9 = vector.broadcast %8 : vector<8x1xf32> to vector<8x128xf32>
    %10 = arith.subf %4, %9 : vector<8x128xf32>
    %11 = arith.mulf %10, %10 : vector<8x128xf32>
    %cst_8 = arith.constant dense<0.000000e+00> : vector<8xf32>
    %12 = vector.multi_reduction <add>, %11, %cst_8 [1] : vector<8x128xf32> to vector<8xf32>
    %13 = vector.shape_cast %12 : vector<8xf32> to vector<8x1xf32>
    %14 = arith.mulf %8, %8 : vector<8x1xf32>
    %cst_9 = arith.constant 1.120000e+02 : f32
    %15 = vector.broadcast %cst_9 : f32 to vector<8x1xf32>
    %16 = arith.mulf %15, %14 : vector<8x1xf32>
    %17 = arith.subf %13, %16 : vector<8x1xf32>
    %cst_10 = arith.constant 0.000000e+00 : f32
    %18 = vector.broadcast %cst_10 : f32 to vector<8x1xf32>
    %19 = arith.maximumf %17, %18 : vector<8x1xf32>
    %cst_11 = arith.constant 6.250000e-02 : f32
    %20 = vector.broadcast %cst_11 : f32 to vector<8x1xf32>
    %21 = arith.mulf %19, %20 : vector<8x1xf32>
    %cst_12 = arith.constant 9.99999974E-6 : f32
    %22 = vector.broadcast %cst_12 : f32 to vector<8x1xf32>
    %23 = arith.addf %21, %22 : vector<8x1xf32>
    %24 = math.rsqrt %23 : vector<8x1xf32>
    %25 = vector.broadcast %24 : vector<8x1xf32> to vector<8x128xf32>
    %26 = arith.mulf %10, %25 : vector<8x128xf32>
    %27 = vector.broadcast %0 : vector<1x128xf32> to vector<8x128xf32>
    %28 = arith.mulf %26, %27 : vector<8x128xf32>
    %29 = vector.broadcast %1 : vector<1x128xf32> to vector<8x128xf32>
    %30 = arith.addf %28, %29 : vector<8x128xf32>
    %31 = arith.truncf %30 : vector<8x128xf32> to vector<8x128xbf16>
    %cst_13 = arith.constant dense<0.000000e+00> : vector<8x128xf32>
    %32 = tpu.matmul %31, %2, %cst_13 {dimension_numbers = #tpu.dot_dimension_numbers<[1], [0], [0], [1], [0, 0, 1, 1], [], []>} : vector<8x128xbf16>, vector<128x128xbf16>, vector<8x128xf32> -> vector<8x128xf32>
    %c1_14 = arith.constant 1 : index
    %c0_15 = arith.constant 0 : index
    %c0_16 = arith.constant 0 : index
    %33 = vector.load %arg1[%c1_14, %c0_15, %c0_16] : memref<4x8x128xf32, #tpu.memory_space<vmem>>, vector<1x8x128xf32>
    %34 = vector.shape_cast %33 : vector<1x8x128xf32> to vector<8x128xf32>
    %cst_17 = arith.constant dense<0.000000e+00> : vector<8xf32>
    %35 = vector.multi_reduction <add>, %34, %cst_17 [1] : vector<8x128xf32> to vector<8xf32>
    %36 = vector.shape_cast %35 : vector<8xf32> to vector<8x1xf32>
    %cst_18 = arith.constant 6.250000e-02 : f32
    %37 = vector.broadcast %cst_18 : f32 to vector<8x1xf32>
    %38 = arith.mulf %36, %37 : vector<8x1xf32>
    %39 = vector.broadcast %38 : vector<8x1xf32> to vector<8x128xf32>
    %40 = arith.subf %34, %39 : vector<8x128xf32>
    %41 = arith.mulf %40, %40 : vector<8x128xf32>
    %cst_19 = arith.constant dense<0.000000e+00> : vector<8xf32>
    %42 = vector.multi_reduction <add>, %41, %cst_19 [1] : vector<8x128xf32> to vector<8xf32>
    %43 = vector.shape_cast %42 : vector<8xf32> to vector<8x1xf32>
    %44 = arith.mulf %38, %38 : vector<8x1xf32>
    %cst_20 = arith.constant 1.120000e+02 : f32
    %45 = vector.broadcast %cst_20 : f32 to vector<8x1xf32>
    %46 = arith.mulf %45, %44 : vector<8x1xf32>
    %47 = arith.subf %43, %46 : vector<8x1xf32>
    %cst_21 = arith.constant 0.000000e+00 : f32
    %48 = vector.broadcast %cst_21 : f32 to vector<8x1xf32>
    %49 = arith.maximumf %47, %48 : vector<8x1xf32>
    %cst_22 = arith.constant 6.250000e-02 : f32
    %50 = vector.broadcast %cst_22 : f32 to vector<8x1xf32>
    %51 = arith.mulf %49, %50 : vector<8x1xf32>
    %cst_23 = arith.constant 9.99999974E-6 : f32
    %52 = vector.broadcast %cst_23 : f32 to vector<8x1xf32>
    %53 = arith.addf %51, %52 : vector<8x1xf32>
    %54 = math.rsqrt %53 : vector<8x1xf32>
    %55 = vector.broadcast %54 : vector<8x1xf32> to vector<8x128xf32>
    %56 = arith.mulf %40, %55 : vector<8x128xf32>
    %57 = vector.broadcast %0 : vector<1x128xf32> to vector<8x128xf32>
    %58 = arith.mulf %56, %57 : vector<8x128xf32>
    %59 = vector.broadcast %1 : vector<1x128xf32> to vector<8x128xf32>
    %60 = arith.addf %58, %59 : vector<8x128xf32>
    %61 = arith.truncf %60 : vector<8x128xf32> to vector<8x128xbf16>
    %cst_24 = arith.constant dense<0.000000e+00> : vector<8x128xf32>
    %62 = tpu.matmul %61, %2, %cst_24 {dimension_numbers = #tpu.dot_dimension_numbers<[1], [0], [0], [1], [0, 0, 1, 1], [], []>} : vector<8x128xbf16>, vector<128x128xbf16>, vector<8x128xf32> -> vector<8x128xf32>
    %63 = arith.maximumf %32, %62 : vector<8x128xf32>
    %c2 = arith.constant 2 : index
    %c0_25 = arith.constant 0 : index
    %c0_26 = arith.constant 0 : index
    %64 = vector.load %arg1[%c2, %c0_25, %c0_26] : memref<4x8x128xf32, #tpu.memory_space<vmem>>, vector<1x8x128xf32>
    %65 = vector.shape_cast %64 : vector<1x8x128xf32> to vector<8x128xf32>
    %cst_27 = arith.constant dense<0.000000e+00> : vector<8xf32>
    %66 = vector.multi_reduction <add>, %65, %cst_27 [1] : vector<8x128xf32> to vector<8xf32>
    %67 = vector.shape_cast %66 : vector<8xf32> to vector<8x1xf32>
    %cst_28 = arith.constant 6.250000e-02 : f32
    %68 = vector.broadcast %cst_28 : f32 to vector<8x1xf32>
    %69 = arith.mulf %67, %68 : vector<8x1xf32>
    %70 = vector.broadcast %69 : vector<8x1xf32> to vector<8x128xf32>
    %71 = arith.subf %65, %70 : vector<8x128xf32>
    %72 = arith.mulf %71, %71 : vector<8x128xf32>
    %cst_29 = arith.constant dense<0.000000e+00> : vector<8xf32>
    %73 = vector.multi_reduction <add>, %72, %cst_29 [1] : vector<8x128xf32> to vector<8xf32>
    %74 = vector.shape_cast %73 : vector<8xf32> to vector<8x1xf32>
    %75 = arith.mulf %69, %69 : vector<8x1xf32>
    %cst_30 = arith.constant 1.120000e+02 : f32
    %76 = vector.broadcast %cst_30 : f32 to vector<8x1xf32>
    %77 = arith.mulf %76, %75 : vector<8x1xf32>
    %78 = arith.subf %74, %77 : vector<8x1xf32>
    %cst_31 = arith.constant 0.000000e+00 : f32
    %79 = vector.broadcast %cst_31 : f32 to vector<8x1xf32>
    %80 = arith.maximumf %78, %79 : vector<8x1xf32>
    %cst_32 = arith.constant 6.250000e-02 : f32
    %81 = vector.broadcast %cst_32 : f32 to vector<8x1xf32>
    %82 = arith.mulf %80, %81 : vector<8x1xf32>
    %cst_33 = arith.constant 9.99999974E-6 : f32
    %83 = vector.broadcast %cst_33 : f32 to vector<8x1xf32>
    %84 = arith.addf %82, %83 : vector<8x1xf32>
    %85 = math.rsqrt %84 : vector<8x1xf32>
    %86 = vector.broadcast %85 : vector<8x1xf32> to vector<8x128xf32>
    %87 = arith.mulf %71, %86 : vector<8x128xf32>
    %88 = vector.broadcast %0 : vector<1x128xf32> to vector<8x128xf32>
    %89 = arith.mulf %87, %88 : vector<8x128xf32>
    %90 = vector.broadcast %1 : vector<1x128xf32> to vector<8x128xf32>
    %91 = arith.addf %89, %90 : vector<8x128xf32>
    %92 = arith.truncf %91 : vector<8x128xf32> to vector<8x128xbf16>
    %cst_34 = arith.constant dense<0.000000e+00> : vector<8x128xf32>
    %93 = tpu.matmul %92, %2, %cst_34 {dimension_numbers = #tpu.dot_dimension_numbers<[1], [0], [0], [1], [0, 0, 1, 1], [], []>} : vector<8x128xbf16>, vector<128x128xbf16>, vector<8x128xf32> -> vector<8x128xf32>
    %94 = arith.maximumf %63, %93 : vector<8x128xf32>
    %c3 = arith.constant 3 : index
    %c0_35 = arith.constant 0 : index
    %c0_36 = arith.constant 0 : index
    %95 = vector.load %arg1[%c3, %c0_35, %c0_36] : memref<4x8x128xf32, #tpu.memory_space<vmem>>, vector<1x8x128xf32>
    %96 = vector.shape_cast %95 : vector<1x8x128xf32> to vector<8x128xf32>
    %cst_37 = arith.constant dense<0.000000e+00> : vector<8xf32>
    %97 = vector.multi_reduction <add>, %96, %cst_37 [1] : vector<8x128xf32> to vector<8xf32>
    %98 = vector.shape_cast %97 : vector<8xf32> to vector<8x1xf32>
    %cst_38 = arith.constant 6.250000e-02 : f32
    %99 = vector.broadcast %cst_38 : f32 to vector<8x1xf32>
    %100 = arith.mulf %98, %99 : vector<8x1xf32>
    %101 = vector.broadcast %100 : vector<8x1xf32> to vector<8x128xf32>
    %102 = arith.subf %96, %101 : vector<8x128xf32>
    %103 = arith.mulf %102, %102 : vector<8x128xf32>
    %cst_39 = arith.constant dense<0.000000e+00> : vector<8xf32>
    %104 = vector.multi_reduction <add>, %103, %cst_39 [1] : vector<8x128xf32> to vector<8xf32>
    %105 = vector.shape_cast %104 : vector<8xf32> to vector<8x1xf32>
    %106 = arith.mulf %100, %100 : vector<8x1xf32>
    %cst_40 = arith.constant 1.120000e+02 : f32
    %107 = vector.broadcast %cst_40 : f32 to vector<8x1xf32>
    %108 = arith.mulf %107, %106 : vector<8x1xf32>
    %109 = arith.subf %105, %108 : vector<8x1xf32>
    %cst_41 = arith.constant 0.000000e+00 : f32
    %110 = vector.broadcast %cst_41 : f32 to vector<8x1xf32>
    %111 = arith.maximumf %109, %110 : vector<8x1xf32>
    %cst_42 = arith.constant 6.250000e-02 : f32
    %112 = vector.broadcast %cst_42 : f32 to vector<8x1xf32>
    %113 = arith.mulf %111, %112 : vector<8x1xf32>
    %cst_43 = arith.constant 9.99999974E-6 : f32
    %114 = vector.broadcast %cst_43 : f32 to vector<8x1xf32>
    %115 = arith.addf %113, %114 : vector<8x1xf32>
    %116 = math.rsqrt %115 : vector<8x1xf32>
    %117 = vector.broadcast %116 : vector<8x1xf32> to vector<8x128xf32>
    %118 = arith.mulf %102, %117 : vector<8x128xf32>
    %119 = vector.broadcast %0 : vector<1x128xf32> to vector<8x128xf32>
    %120 = arith.mulf %118, %119 : vector<8x128xf32>
    %121 = vector.broadcast %1 : vector<1x128xf32> to vector<8x128xf32>
    %122 = arith.addf %120, %121 : vector<8x128xf32>
    %123 = arith.truncf %122 : vector<8x128xf32> to vector<8x128xbf16>
    %cst_44 = arith.constant dense<0.000000e+00> : vector<8x128xf32>
    %124 = tpu.matmul %123, %2, %cst_44 {dimension_numbers = #tpu.dot_dimension_numbers<[1], [0], [0], [1], [0, 0, 1, 1], [], []>} : vector<8x128xbf16>, vector<128x128xbf16>, vector<8x128xf32> -> vector<8x128xf32>
    %125 = arith.maximumf %94, %124 : vector<8x128xf32>
    %c0_45 = arith.constant 0 : index
    %c0_46 = arith.constant 0 : index
    %126 = vector.load %arg4[%c0_45, %c0_46] : memref<8x128xf32, #tpu.memory_space<vmem>>, vector<8x128xf32>
    tpu.vector_store %arg4[%c0_45, %c0_46], %125 {strides = array<i32>} : memref<8x128xf32, #tpu.memory_space<vmem>>, vector<8x128xf32>,
    return
  }
  func.func @transform_0(%arg0: i32) -> (i32, i32, i32) {
    %c0_i32 = arith.constant 0 : i32
    %c0_i32_0 = arith.constant 0 : i32
    %c0_i32_1 = arith.constant 0 : i32
    return %c0_i32, %arg0, %c0_i32_0 : i32, i32, i32
  }
  func.func @transform_1(%arg0: i32) -> (i32, i32) {
    %c0_i32 = arith.constant 0 : i32
    %c0_i32_0 = arith.constant 0 : i32
    %c0_i32_1 = arith.constant 0 : i32
    return %c0_i32, %c0_i32_0 : i32, i32
  }
  func.func @transform_2(%arg0: i32) -> (i32, i32) {
    %c0_i32 = arith.constant 0 : i32
    %c0_i32_0 = arith.constant 0 : i32
    %c0_i32_1 = arith.constant 0 : i32
    return %c0_i32, %c0_i32_0 : i32, i32
  }
  func.func @transform_3(%arg0: i32) -> (i32, i32) {
    %c0_i32 = arith.constant 0 : i32
    %c0_i32_0 = arith.constant 0 : i32
    return %arg0, %c0_i32 : i32, i32
  }
}

module attributes {stable_mosaic.version = 11 : i64} {
  func.func @_transition_down_kernel(%arg0: i32, %arg1: memref<4x8x128xf32, #tpu.memory_space<vmem>>, %arg2: memref<2x128xf32, #tpu.memory_space<vmem>>, %arg3: memref<128x128xbf16, #tpu.memory_space<vmem>>, %arg4: memref<8x128xf32, #tpu.memory_space<vmem>>) attributes {dimension_semantics = [#tpu.dimension_semantics<parallel>], iteration_bounds = array<i64: 2>, scalar_prefetch = 0 : i64, scratch_operands = 0 : i64, tpu.core_type = #tpu.core_type<tc>, window_params = [{transform_indices = @transform_0, window_bounds = array<i64: 4, 8, 128>}, {pipeline_mode = #tpu.pipeline_mode<synchronous>, transform_indices = @transform_1, window_bounds = array<i64: 2, 128>}, {pipeline_mode = #tpu.pipeline_mode<synchronous>, transform_indices = @transform_2, window_bounds = array<i64: 128, 128>}, {transform_indices = @transform_3, window_bounds = array<i64: 8, 128>}]} {
    %c0 = arith.constant 0 : index
    %c0_0 = arith.constant 0 : index
    %0 = vector.load %arg2[%c0, %c0_0] : memref<2x128xf32, #tpu.memory_space<vmem>>, vector<1x128xf32>
    %c1 = arith.constant 1 : index
    %c0_1 = arith.constant 0 : index
    %1 = vector.load %arg2[%c1, %c0_1] : memref<2x128xf32, #tpu.memory_space<vmem>>, vector<1x128xf32>
    %c0_2 = arith.constant 0 : index
    %c0_3 = arith.constant 0 : index
    %2 = vector.load %arg3[%c0_2, %c0_3] : memref<128x128xbf16, #tpu.memory_space<vmem>>, vector<128x128xbf16>
    %c0_4 = arith.constant 0 : index
    %c0_5 = arith.constant 0 : index
    %c0_6 = arith.constant 0 : index
    %3 = vector.load %arg1[%c0_4, %c0_5, %c0_6] : memref<4x8x128xf32, #tpu.memory_space<vmem>>, vector<1x8x128xf32>
    %4 = vector.shape_cast %3 : vector<1x8x128xf32> to vector<8x128xf32>
    %cst = arith.constant dense<0.000000e+00> : vector<8xf32>
    %5 = vector.multi_reduction <add>, %4, %cst [1] : vector<8x128xf32> to vector<8xf32>
    %6 = vector.shape_cast %5 : vector<8xf32> to vector<8x1xf32>
    %cst_7 = arith.constant 6.250000e-02 : f32
    %7 = vector.broadcast %cst_7 : f32 to vector<8x1xf32>
    %8 = arith.mulf %6, %7 : vector<8x1xf32>
    %9 = vector.broadcast %8 : vector<8x1xf32> to vector<8x128xf32>
    %10 = arith.subf %4, %9 : vector<8x128xf32>
    %11 = arith.mulf %10, %10 : vector<8x128xf32>
    %cst_8 = arith.constant dense<0.000000e+00> : vector<8xf32>
    %12 = vector.multi_reduction <add>, %11, %cst_8 [1] : vector<8x128xf32> to vector<8xf32>
    %13 = vector.shape_cast %12 : vector<8xf32> to vector<8x1xf32>
    %14 = arith.mulf %8, %8 : vector<8x1xf32>
    %cst_9 = arith.constant 1.120000e+02 : f32
    %15 = vector.broadcast %cst_9 : f32 to vector<8x1xf32>
    %16 = arith.mulf %15, %14 : vector<8x1xf32>
    %17 = arith.subf %13, %16 : vector<8x1xf32>
    %cst_10 = arith.constant 0.000000e+00 : f32
    %18 = vector.broadcast %cst_10 : f32 to vector<8x1xf32>
    %19 = arith.maximumf %17, %18 : vector<8x1xf32>
    %cst_11 = arith.constant 6.250000e-02 : f32
    %20 = vector.broadcast %cst_11 : f32 to vector<8x1xf32>
    %21 = arith.mulf %19, %20 : vector<8x1xf32>
    %cst_12 = arith.constant 9.99999974E-6 : f32
    %22 = vector.broadcast %cst_12 : f32 to vector<8x1xf32>
    %23 = arith.addf %21, %22 : vector<8x1xf32>
    %24 = math.rsqrt %23 : vector<8x1xf32>
    %25 = vector.broadcast %24 : vector<8x1xf32> to vector<8x128xf32>
    %26 = arith.mulf %10, %25 : vector<8x128xf32>
    %27 = vector.broadcast %0 : vector<1x128xf32> to vector<8x128xf32>
    %28 = arith.mulf %26, %27 : vector<8x128xf32>
    %29 = vector.broadcast %1 : vector<1x128xf32> to vector<8x128xf32>
    %30 = arith.addf %28, %29 : vector<8x128xf32>
    %31 = arith.truncf %30 : vector<8x128xf32> to vector<8x128xbf16>
    %cst_13 = arith.constant dense<0.000000e+00> : vector<8x128xf32>
    %32 = tpu.matmul %31, %2, %cst_13 {dimension_numbers = #tpu.dot_dimension_numbers<[1], [0], [0], [1], [0, 0, 1, 1], [], []>} : vector<8x128xbf16>, vector<128x128xbf16>, vector<8x128xf32> -> vector<8x128xf32>
    %c1_14 = arith.constant 1 : index
    %c0_15 = arith.constant 0 : index
    %c0_16 = arith.constant 0 : index
    %33 = vector.load %arg1[%c1_14, %c0_15, %c0_16] : memref<4x8x128xf32, #tpu.memory_space<vmem>>, vector<1x8x128xf32>
    %34 = vector.shape_cast %33 : vector<1x8x128xf32> to vector<8x128xf32>
    %cst_17 = arith.constant dense<0.000000e+00> : vector<8xf32>
    %35 = vector.multi_reduction <add>, %34, %cst_17 [1] : vector<8x128xf32> to vector<8xf32>
    %36 = vector.shape_cast %35 : vector<8xf32> to vector<8x1xf32>
    %cst_18 = arith.constant 6.250000e-02 : f32
    %37 = vector.broadcast %cst_18 : f32 to vector<8x1xf32>
    %38 = arith.mulf %36, %37 : vector<8x1xf32>
    %39 = vector.broadcast %38 : vector<8x1xf32> to vector<8x128xf32>
    %40 = arith.subf %34, %39 : vector<8x128xf32>
    %41 = arith.mulf %40, %40 : vector<8x128xf32>
    %cst_19 = arith.constant dense<0.000000e+00> : vector<8xf32>
    %42 = vector.multi_reduction <add>, %41, %cst_19 [1] : vector<8x128xf32> to vector<8xf32>
    %43 = vector.shape_cast %42 : vector<8xf32> to vector<8x1xf32>
    %44 = arith.mulf %38, %38 : vector<8x1xf32>
    %cst_20 = arith.constant 1.120000e+02 : f32
    %45 = vector.broadcast %cst_20 : f32 to vector<8x1xf32>
    %46 = arith.mulf %45, %44 : vector<8x1xf32>
    %47 = arith.subf %43, %46 : vector<8x1xf32>
    %cst_21 = arith.constant 0.000000e+00 : f32
    %48 = vector.broadcast %cst_21 : f32 to vector<8x1xf32>
    %49 = arith.maximumf %47, %48 : vector<8x1xf32>
    %cst_22 = arith.constant 6.250000e-02 : f32
    %50 = vector.broadcast %cst_22 : f32 to vector<8x1xf32>
    %51 = arith.mulf %49, %50 : vector<8x1xf32>
    %cst_23 = arith.constant 9.99999974E-6 : f32
    %52 = vector.broadcast %cst_23 : f32 to vector<8x1xf32>
    %53 = arith.addf %51, %52 : vector<8x1xf32>
    %54 = math.rsqrt %53 : vector<8x1xf32>
    %55 = vector.broadcast %54 : vector<8x1xf32> to vector<8x128xf32>
    %56 = arith.mulf %40, %55 : vector<8x128xf32>
    %57 = vector.broadcast %0 : vector<1x128xf32> to vector<8x128xf32>
    %58 = arith.mulf %56, %57 : vector<8x128xf32>
    %59 = vector.broadcast %1 : vector<1x128xf32> to vector<8x128xf32>
    %60 = arith.addf %58, %59 : vector<8x128xf32>
    %61 = arith.truncf %60 : vector<8x128xf32> to vector<8x128xbf16>
    %cst_24 = arith.constant dense<0.000000e+00> : vector<8x128xf32>
    %62 = tpu.matmul %61, %2, %cst_24 {dimension_numbers = #tpu.dot_dimension_numbers<[1], [0], [0], [1], [0, 0, 1, 1], [], []>} : vector<8x128xbf16>, vector<128x128xbf16>, vector<8x128xf32> -> vector<8x128xf32>
    %63 = arith.maximumf %32, %62 : vector<8x128xf32>
    %c2 = arith.constant 2 : index
    %c0_25 = arith.constant 0 : index
    %c0_26 = arith.constant 0 : index
    %64 = vector.load %arg1[%c2, %c0_25, %c0_26] : memref<4x8x128xf32, #tpu.memory_space<vmem>>, vector<1x8x128xf32>
    %65 = vector.shape_cast %64 : vector<1x8x128xf32> to vector<8x128xf32>
    %cst_27 = arith.constant dense<0.000000e+00> : vector<8xf32>
    %66 = vector.multi_reduction <add>, %65, %cst_27 [1] : vector<8x128xf32> to vector<8xf32>
    %67 = vector.shape_cast %66 : vector<8xf32> to vector<8x1xf32>
    %cst_28 = arith.constant 6.250000e-02 : f32
    %68 = vector.broadcast %cst_28 : f32 to vector<8x1xf32>
    %69 = arith.mulf %67, %68 : vector<8x1xf32>
    %70 = vector.broadcast %69 : vector<8x1xf32> to vector<8x128xf32>
    %71 = arith.subf %65, %70 : vector<8x128xf32>
    %72 = arith.mulf %71, %71 : vector<8x128xf32>
    %cst_29 = arith.constant dense<0.000000e+00> : vector<8xf32>
    %73 = vector.multi_reduction <add>, %72, %cst_29 [1] : vector<8x128xf32> to vector<8xf32>
    %74 = vector.shape_cast %73 : vector<8xf32> to vector<8x1xf32>
    %75 = arith.mulf %69, %69 : vector<8x1xf32>
    %cst_30 = arith.constant 1.120000e+02 : f32
    %76 = vector.broadcast %cst_30 : f32 to vector<8x1xf32>
    %77 = arith.mulf %76, %75 : vector<8x1xf32>
    %78 = arith.subf %74, %77 : vector<8x1xf32>
    %cst_31 = arith.constant 0.000000e+00 : f32
    %79 = vector.broadcast %cst_31 : f32 to vector<8x1xf32>
    %80 = arith.maximumf %78, %79 : vector<8x1xf32>
    %cst_32 = arith.constant 6.250000e-02 : f32
    %81 = vector.broadcast %cst_32 : f32 to vector<8x1xf32>
    %82 = arith.mulf %80, %81 : vector<8x1xf32>
    %cst_33 = arith.constant 9.99999974E-6 : f32
    %83 = vector.broadcast %cst_33 : f32 to vector<8x1xf32>
    %84 = arith.addf %82, %83 : vector<8x1xf32>
    %85 = math.rsqrt %84 : vector<8x1xf32>
    %86 = vector.broadcast %85 : vector<8x1xf32> to vector<8x128xf32>
    %87 = arith.mulf %71, %86 : vector<8x128xf32>
    %88 = vector.broadcast %0 : vector<1x128xf32> to vector<8x128xf32>
    %89 = arith.mulf %87, %88 : vector<8x128xf32>
    %90 = vector.broadcast %1 : vector<1x128xf32> to vector<8x128xf32>
    %91 = arith.addf %89, %90 : vector<8x128xf32>
    %92 = arith.truncf %91 : vector<8x128xf32> to vector<8x128xbf16>
    %cst_34 = arith.constant dense<0.000000e+00> : vector<8x128xf32>
    %93 = tpu.matmul %92, %2, %cst_34 {dimension_numbers = #tpu.dot_dimension_numbers<[1], [0], [0], [1], [0, 0, 1, 1], [], []>} : vector<8x128xbf16>, vector<128x128xbf16>, vector<8x128xf32> -> vector<8x128xf32>
    %94 = arith.maximumf %63, %93 : vector<8x128xf32>
    %c3 = arith.constant 3 : index
    %c0_35 = arith.constant 0 : index
    %c0_36 = arith.constant 0 : index
    %95 = vector.load %arg1[%c3, %c0_35, %c0_36] : memref<4x8x128xf32, #tpu.memory_space<vmem>>, vector<1x8x128xf32>
    %96 = vector.shape_cast %95 : vector<1x8x128xf32> to vector<8x128xf32>
    %cst_37 = arith.constant dense<0.000000e+00> : vector<8xf32>
    %97 = vector.multi_reduction <add>, %96, %cst_37 [1] : vector<8x128xf32> to vector<8xf32>
    %98 = vector.shape_cast %97 : vector<8xf32> to vector<8x1xf32>
    %cst_38 = arith.constant 6.250000e-02 : f32
    %99 = vector.broadcast %cst_38 : f32 to vector<8x1xf32>
    %100 = arith.mulf %98, %99 : vector<8x1xf32>
    %101 = vector.broadcast %100 : vector<8x1xf32> to vector<8x128xf32>
    %102 = arith.subf %96, %101 : vector<8x128xf32>
    %103 = arith.mulf %102, %102 : vector<8x128xf32>
    %cst_39 = arith.constant dense<0.000000e+00> : vector<8xf32>
    %104 = vector.multi_reduction <add>, %103, %cst_39 [1] : vector<8x128xf32> to vector<8xf32>
    %105 = vector.shape_cast %104 : vector<8xf32> to vector<8x1xf32>
    %106 = arith.mulf %100, %100 : vector<8x1xf32>
    %cst_40 = arith.constant 1.120000e+02 : f32
    %107 = vector.broadcast %cst_40 : f32 to vector<8x1xf32>
    %108 = arith.mulf %107, %106 : vector<8x1xf32>
    %109 = arith.subf %105, %108 : vector<8x1xf32>
    %cst_41 = arith.constant 0.000000e+00 : f32
    %110 = vector.broadcast %cst_41 : f32 to vector<8x1xf32>
    %111 = arith.maximumf %109, %110 : vector<8x1xf32>
    %cst_42 = arith.constant 6.250000e-02 : f32
    %112 = vector.broadcast %cst_42 : f32 to vector<8x1xf32>
    %113 = arith.mulf %111, %112 : vector<8x1xf32>
    %cst_43 = arith.constant 9.99999974E-6 : f32
    %114 = vector.broadcast %cst_43 : f32 to vector<8x1xf32>
    %115 = arith.addf %113, %114 : vector<8x1xf32>
    %116 = math.rsqrt %115 : vector<8x1xf32>
    %117 = vector.broadcast %116 : vector<8x1xf32> to vector<8x128xf32>
    %118 = arith.mulf %102, %117 : vector<8x128xf32>
    %119 = vector.broadcast %0 : vector<1x128xf32> to vector<8x128xf32>
    %120 = arith.mulf %118, %119 : vector<8x128xf32>
    %121 = vector.broadcast %1 : vector<1x128xf32> to vector<8x128xf32>
    %122 = arith.addf %120, %121 : vector<8x128xf32>
    %123 = arith.truncf %122 : vector<8x128xf32> to vector<8x128xbf16>
    %cst_44 = arith.constant dense<0.000000e+00> : vector<8x128xf32>
    %124 = tpu.matmul %123, %2, %cst_44 {dimension_numbers = #tpu.dot_dimension_numbers<[1], [0], [0], [1], [0, 0, 1, 1], [], []>} : vector<8x128xbf16>, vector<128x128xbf16>, vector<8x128xf32> -> vector<8x128xf32>
    %125 = arith.maximumf %94, %124 : vector<8x128xf32>
    %c0_45 = arith.constant 0 : index
    %c0_46 = arith.constant 0 : index
    %126 = vector.load %arg4[%c0_45, %c0_46] : memref<8x128xf32, #tpu.memory_space<vmem>>, vector<8x128xf32>
    tpu.vector_store %arg4[%c0_45, %c0_46], %125 {strides = array<i32>} : memref<8x128xf32, #tpu.memory_space<vmem>>, vector<8x128xf32>,
    return
  }
  func.func @transform_0(%arg0: i32) -> (i32, i32, i32) {
    %c0_i32 = arith.constant 0 : i32
    %c0_i32_0 = arith.constant 0 : i32
    %c0_i32_1 = arith.constant 0 : i32
    return %c0_i32, %arg0, %c0_i32_0 : i32, i32, i32
  }
  func.func @transform_1(%arg0: i32) -> (i32, i32) {
    %c0_i32 = arith.constant 0 : i32
    %c0_i32_0 = arith.constant 0 : i32
    %c0_i32_1 = arith.constant 0 : i32
    return %c0_i32, %c0_i32_0 : i32, i32
  }
  func.func @transform_2(%arg0: i32) -> (i32, i32) {
    %c0_i32 = arith.constant 0 : i32
    %c0_i32_0 = arith.constant 0 : i32
    %c0_i32_1 = arith.constant 0 : i32
    return %c0_i32, %c0_i32_0 : i32, i32
  }
  func.func @transform_3(%arg0: i32) -> (i32, i32) {
    %c0_i32 = arith.constant 0 : i32
    %c0_i32_0 = arith.constant 0 : i32
    return %arg0, %c0_i32 : i32, i32
  }
}

</mosaic_0001>

<llo_original>
// kernel: tpu_custom_call.1
$region0: #{tpu_custom_call.1}
  #allocation0 [shape = 'u32[]', space=smem, size = 0x4, offset = 0x4, fixed_abs, tag = 'smem constant byte address 0x4 - core index']
  #allocation1 [shape = 'u32[144,128]{1,0:T(1,128)}', space=vmem, size = 0x12000, scoped, tag = 'internal scratch']
  %s0 = inlined_call_operand.hbm [shape: f32[4,16,128], index: 0, kind: input, shape index: {}]
  %s1 = inlined_call_operand.hbm [shape: f32[2,128], index: 1, kind: input, shape index: {}]
  %s2 = inlined_call_operand.hbm [shape: bf16[128,128], index: 2, kind: input, shape index: {}]
  %s3 = inlined_call_operand.hbm [shape: f32[16,128], index: 3, kind: output, shape index: {}]
  %s4 = sld [smem:[#allocation0]]
  $region57: #{tpu_custom_call.1} parent=0
    _
  %s6 = ssub.s32 1, %s4
  %s7 = scalar_select 0, %s6, %s4
  $region1: #{tpu_custom_call.1} parent=0
    #allocation2 [shape = 'u8[32768]{0}', space=vmem, size = 0x8000, scoped, tag = 'input window, operand 0']
    #allocation3 [shape = 's32[2]{0}', space=sflag, size = 0x8, scoped, tag = 'scoped memory for tpu_custom_call.1']
    #allocation4 [shape = 's32[2]{0}', space=sflag, size = 0x8, scoped, tag = 'scoped memory for tpu_custom_call.1']
    #allocation5 [shape = 'u8[1024]{0}', space=vmem, size = 0x400, scoped, tag = 'input window, operand 1, single buffered']
    #allocation6 [shape = 's32[1]{0}', space=sflag, size = 0x4, scoped, tag = 'scoped memory for tpu_custom_call.1']
    #allocation7 [shape = 'u8[32768]{0}', space=vmem, size = 0x8000, scoped, tag = 'input window, operand 2, single buffered']
    #allocation8 [shape = 'u8[8192]{0}', space=vmem, size = 0x2000, scoped, tag = 'output window, operand 0']
    %8 = vsyncpa [#allocation3], 0
    %s9 = scalar_lea.sflag [#allocation3], 1
    %10 = vsyncpa %s9, 0
    %11 = vsyncpa [#allocation6], 0
    %12 = vsyncpa [#allocation4], 0
    %s13 = scalar_lea.sflag [#allocation4], 1
    %14 = vsyncpa %s13, 0
    loop: start=0, step=1, limit=4
    $region2: #{tpu_custom_call.1} parent=1 // loop_pre_header
      _
    $region3: #{tpu_custom_call.1} parent=1 // loop_header
      %s16 = sphi 0, %s20
      %p17 = scmp.ge.s32.totalorder %s16, 4
      %s26 = sphi 0, %s28
      %s29 = sphi 0, %s26
      %s30 = sphi 0, %s29
      %s46 = sphi 0, %s30
      %s50 = sphi 0, %s50
      %s52 = sphi 0, %s50
      %s53 = sphi 0, %s52
      %s67 = sphi 0, %s53
      %s71 = sphi 0, %s71
      %s73 = sphi 0, %s71
      %s74 = sphi 0, %s73
      %s88 = sphi 0, %s74
      %s94 = sphi 0, %s96
      %s97 = sphi 0, %s94
      %s98 = sphi 0, %s97
      %s114 = sphi 0, %s98
    $region4: #{tpu_custom_call.1} parent=1 // loop_header_branch
      %19 = sbr.rel (%p17) target = $region8
    $region5: #{tpu_custom_call.1} parent=1 // loop_body
      %s21 = ssub.s32 %s16, 1
      %s22 = ssub.s32 %s16, 2
      %s23 = sadd.s32 %s16, 1
      %s24 = ssub.s32 %s16, %s23
      %p25 = scmp.eq.s32.totalorder %s24, 0
      %s27 = sadd.s32 %s26, 1
      %s28 = scalar_select %p25, %s26, %s27
      %p31 = pneg %p25
      %p32 = scmp.eq.s32.totalorder %s16, 1
      %p33 = por %p31, %p32
      %p34 = scmp.ne.s32.totalorder %s26, %s29
      %p35 = scmp.eq.s32.totalorder %s16, 0
      %p36 = por %p34, %p35
      %p37 = scmp.ne.s32.totalorder %s26, %s29
      %p38 = scmp.eq.s32.totalorder %s21, 1
      %p39 = por %p37, %p38
      %p40 = scmp.ne.s32.totalorder %s29, %s30
      %p41 = scmp.eq.s32.totalorder %s21, 0
      %p42 = por %p40, %p41
      %p43 = scmp.ne.s32.totalorder %s29, %s30
      %p44 = scmp.eq.s32.totalorder %s22, 1
      %p45 = por %p43, %p44
      %p47 = scmp.ne.s32.totalorder %s30, %s46
      %p48 = scmp.eq.s32.totalorder %s22, 0
      %p49 = por %p47, %p48
      %s51 = sadd.s32 %s50, 1
      %p54 = scmp.eq.s32.totalorder %s16, 1
      %p55 = scmp.ne.s32.totalorder %s50, %s52
      %p56 = scmp.eq.s32.totalorder %s16, 0
      %p57 = por %p55, %p56
      %p58 = scmp.ne.s32.totalorder %s50, %s52
      %p59 = scmp.eq.s32.totalorder %s21, 1
      %p60 = por %p58, %p59
      %p61 = scmp.ne.s32.totalorder %s52, %s53
      %p62 = scmp.eq.s32.totalorder %s21, 0
      %p63 = por %p61, %p62
      %p64 = scmp.ne.s32.totalorder %s52, %s53
      %p65 = scmp.eq.s32.totalorder %s22, 1
      %p66 = por %p64, %p65
      %p68 = scmp.ne.s32.totalorder %s53, %s67
      %p69 = scmp.eq.s32.totalorder %s22, 0
      %p70 = por %p68, %p69
      %s72 = sadd.s32 %s71, 1
      %p75 = scmp.eq.s32.totalorder %s16, 1
      %p76 = scmp.ne.s32.totalorder %s71, %s73
      %p77 = scmp.eq.s32.totalorder %s16, 0
      %p78 = por %p76, %p77
      %p79 = scmp.ne.s32.totalorder %s71, %s73
      %p80 = scmp.eq.s32.totalorder %s21, 1
      %p81 = por %p79, %p80
      %p82 = scmp.ne.s32.totalorder %s73, %s74
      %p83 = scmp.eq.s32.totalorder %s21, 0
      %p84 = por %p82, %p83
      %p85 = scmp.ne.s32.totalorder %s73, %s74
      %p86 = scmp.eq.s32.totalorder %s22, 1
      %p87 = por %p85, %p86
      %p89 = scmp.ne.s32.totalorder %s74, %s88
      %p90 = scmp.eq.s32.totalorder %s22, 0
      %p91 = por %p89, %p90
      %s92 = ssub.s32 %s16, %s23
      %p93 = scmp.eq.s32.totalorder %s92, 0
      %s95 = sadd.s32 %s94, 1
      %s96 = scalar_select %p93, %s94, %s95
      %p99 = pneg %p93
      %p100 = scmp.eq.s32.totalorder %s16, 1
      %p101 = por %p99, %p100
      %p102 = scmp.ne.s32.totalorder %s94, %s97
      %p103 = scmp.eq.s32.totalorder %s16, 0
      %p104 = por %p102, %p103
      %p105 = scmp.ne.s32.totalorder %s94, %s97
      %p106 = scmp.eq.s32.totalorder %s21, 1
      %p107 = por %p105, %p106
      %p108 = scmp.ne.s32.totalorder %s97, %s98
      %p109 = scmp.eq.s32.totalorder %s21, 0
      %p110 = por %p108, %p109
      %p111 = scmp.ne.s32.totalorder %s97, %s98
      %p112 = scmp.eq.s32.totalorder %s22, 1
      %p113 = por %p111, %p112
      %p115 = scmp.ne.s32.totalorder %s98, %s114
      %p116 = scmp.eq.s32.totalorder %s22, 0
      %p117 = por %p115, %p116
      %p118 = scmp.le.s32.totalorder 1, %s16
      %p119 = scmp.lt.s32.totalorder %s16, 3
      %p120 = pnand %p118, %p119
      %p121 = pneg %p120
      // Predicated region
      $region9: #{tpu_custom_call.1} parent=5 // pred_check
        _
      $region10: #{tpu_custom_call.1} parent=5 // pred_check_branch
        %123 = sbr.rel (%p120) target = $region12
      $region11: #{tpu_custom_call.1} parent=5 // pred_region
        %s124 = ssub.s32 %s16, 1
        // Predicated region
        $region13: #{tpu_custom_call.1} parent=11 // pred_check
          %p125 = pneg %p63
        $region14: #{tpu_custom_call.1} parent=11 // pred_check_branch
          %127 = sbr.rel (%p125) target = $region16
        $region15: #{tpu_custom_call.1} parent=11 // pred_region
          %s129 = ssub.s32 32, 32
          %130 = vsyncadd [#allocation6], %s129
          %s132 = sshll.u32 [#allocation5], 4
          %s133 = int_to_ptr.vmem [resolvable:$true] %s132
          %135 = dma.hbm_to_vmem [thread:$0]  %s1, 32, %s133, [#allocation6]
        $region16: #{tpu_custom_call.1} parent=11 // pred_fallthru
          _
        // Predicated region
        $region17: #{tpu_custom_call.1} parent=11 // pred_check
          %p136 = pneg %p84
        $region18: #{tpu_custom_call.1} parent=11 // pred_check_branch
          %138 = sbr.rel (%p136) target = $region20
        $region19: #{tpu_custom_call.1} parent=11 // pred_region
          %s140 = ssub.s32 1024, 1024
          %141 = vsyncadd [#allocation6], %s140
          %s142 = sshll.u32 [#allocation7], 4
          %s143 = int_to_ptr.vmem [resolvable:$true] %s142
          %148 = dma.hbm_to_vmem [thread:$0]  %s2, 1024, %s143, [#allocation6], 64, 64, 4
        $region20: #{tpu_custom_call.1} parent=11 // pred_fallthru
          _
      $region12: #{tpu_custom_call.1} parent=5 // pred_fallthru
        _
      %p149 = scmp.lt.s32.totalorder %s16, 2
      // Predicated region
      $region21: #{tpu_custom_call.1} parent=5 // pred_check
        %p150 = pneg %p149
      $region22: #{tpu_custom_call.1} parent=5 // pred_check_branch
        %152 = sbr.rel (%p150) target = $region24
      $region23: #{tpu_custom_call.1} parent=5 // pred_region
        // Predicated region
        $region25: #{tpu_custom_call.1} parent=23 // pred_check
          %p153 = pneg %p36
        $region26: #{tpu_custom_call.1} parent=23 // pred_check_branch
          %155 = sbr.rel (%p153) target = $region28
        $region27: #{tpu_custom_call.1} parent=23 // pred_region
          %s156 = sand.u32 %s26, 1
          %s157 = scalar_lea.sflag [#allocation3], %s156
          %s158 = sand.u32 %s26, 1
          %s159 = smul.addr %s158, 32
          %s160 = scalar_lea.vmem [#allocation2], %s159
          %s162 = ssub.s32 512, 512
          %163 = vsyncadd %s157, %s162
          %s164 = smul.addr %s16, 128
          %s165 = scalar_lea.hbm %s0, %s164
          %s166 = sshll.u32 %s160, 4
          %s167 = int_to_ptr.vmem [resolvable:$true] %s166
          %172 = dma.hbm_to_vmem [thread:$0]  %s165, 512, %s167, %s157, 256, 128, 8
        $region28: #{tpu_custom_call.1} parent=23 // pred_fallthru
          _
      $region24: #{tpu_custom_call.1} parent=5 // pred_fallthru
        _
      %p173 = scmp.le.s32.totalorder 1, %s16
      %p174 = scmp.lt.s32.totalorder %s16, 3
      %p175 = pnand %p173, %p174
      %p176 = pneg %p175
      // Predicated region
      $region29: #{tpu_custom_call.1} parent=5 // pred_check
        _
      $region30: #{tpu_custom_call.1} parent=5 // pred_check_branch
        %178 = sbr.rel (%p175) target = $region32
      $region31: #{tpu_custom_call.1} parent=5 // pred_region
        %s179 = ssub.s32 %s16, 1
        %s180 = sand.u32 %s29, 1
        %s181 = scalar_lea.sflag [#allocation3], %s180
        %s182 = sand.u32 %s29, 1
        %s183 = smul.addr %s182, 32
        %s184 = scalar_lea.vmem [#allocation2], %s183
        // Predicated region
        $region33: #{tpu_custom_call.1} parent=31 // pred_check
          %p185 = pneg %p42
        $region34: #{tpu_custom_call.1} parent=31 // pred_check_branch
          %187 = sbr.rel (%p185) target = $region36
        $region35: #{tpu_custom_call.1} parent=31 // pred_region
          %188 = dma.done %s181, 512
        $region36: #{tpu_custom_call.1} parent=31 // pred_fallthru
          _
        // Predicated region
        $region37: #{tpu_custom_call.1} parent=31 // pred_check
          %p189 = pneg %p63
        $region38: #{tpu_custom_call.1} parent=31 // pred_check_branch
          %191 = sbr.rel (%p189) target = $region40
        $region39: #{tpu_custom_call.1} parent=31 // pred_region
          %192 = dma.done [#allocation6], 32
        $region40: #{tpu_custom_call.1} parent=31 // pred_fallthru
          _
        // Predicated region
        $region41: #{tpu_custom_call.1} parent=31 // pred_check
          %p193 = pneg %p84
        $region42: #{tpu_custom_call.1} parent=31 // pred_check_branch
          %195 = sbr.rel (%p193) target = $region44
        $region43: #{tpu_custom_call.1} parent=31 // pred_region
          %196 = dma.done [#allocation6], 1024
        $region44: #{tpu_custom_call.1} parent=31 // pred_fallthru
          _
        %s197 = sand.u32 %s29, 1
        %s198 = scalar_lea.sflag [#allocation3], %s197
        %s199 = sand.u32 %s29, 1
        %s200 = smul.addr %s199, 32
        %s201 = scalar_lea.vmem [#allocation2], %s200
        %p202 = pneg %p42
        %p203 = pneg %p39
        %p204 = pneg %p63
        %p205 = pneg %p60
        %p206 = pneg %p84
        %p207 = pneg %p81
        %p208 = pneg %p110
        %p209 = pneg %p107
        %s210 = sand.u32 %s97, 1
        %s211 = scalar_lea.sflag [#allocation4], %s210
        %s212 = sand.u32 %s97, 1
        %s213 = smul.addr %s212, 8
        %s214 = scalar_lea.vmem [#allocation8], %s213
        %v216 = vld [vmem:[#allocation5] sm:$0x1]
        %v217 = vld [vmem:[#allocation5 + $0x1] sm:$0x1]
        %v218 = vld [vmem:[#allocation7] sm:$0xf]
        %v219 = vld [vmem:[#allocation7 + $0x4] sm:$0xf]
        %v220 = vld [vmem:[#allocation7 + $0x8] sm:$0xf]
        %v221 = vld [vmem:[#allocation7 + $0xc] sm:$0xf]
        %v222 = vld [vmem:[#allocation7 + $0x10] sm:$0xf]
        %v223 = vld [vmem:[#allocation7 + $0x14] sm:$0xf]
        %v224 = vld [vmem:[#allocation7 + $0x18] sm:$0xf]
        %v225 = vld [vmem:[#allocation7 + $0x1c] sm:$0xf]
        %v226 = vld [vmem:[#allocation7 + $0x20] sm:$0xf]
        %v227 = vld [vmem:[#allocation7 + $0x24] sm:$0xf]
        %v228 = vld [vmem:[#allocation7 + $0x28] sm:$0xf]
        %v229 = vld [vmem:[#allocation7 + $0x2c] sm:$0xf]
        %v230 = vld [vmem:[#allocation7 + $0x30] sm:$0xf]
        %v231 = vld [vmem:[#allocation7 + $0x34] sm:$0xf]
        %v232 = vld [vmem:[#allocation7 + $0x38] sm:$0xf]
        %v233 = vld [vmem:[#allocation7 + $0x3c] sm:$0xf]
        %v234 = vld [vmem:[%s184] sm:$0xff]
        %235 = vadd.xlane.f32.xlu0 %v234
        %v236 = vpop.xlane.xlu0 %235
        %v237 = vmul.f32 %v236, 0.0625
        %v238 = vsub.f32 %v234, %v237
        %v239 = vmul.f32 %v238, %v238
        %240 = vadd.xlane.f32.xlu0 %v239
        %v241 = vpop.xlane.xlu0 %240
        %v242 = vmul.f32 %v237, %v237
        %v243 = vmul.f32 %v242, 112.0
        %v244 = vsub.f32 %v241, %v243
        %v245 = vmax.f32 %v244, 0.0
        %v246 = vmul.f32 %v245, 0.0625
        %v247 = vadd.f32 %v246, 1e-05
        %v248 = vrsqrt.pop %v247
        %v249 = vmul.f32 %v238, %v248
        %v250 = vlaneseq
        %v251 = vshrl.u32 %v250, 7
        %v252 = vsub.s32 0, %v251
        %v253 = vrot.slane %v216, %v252
        %v254 = vmul.f32 %v249, %v253
        %v255 = vlaneseq
        %v256 = vshrl.u32 %v255, 7
        %v257 = vsub.s32 0, %v256
        %v258 = vrot.slane %v217, %v257
        %v259 = vadd.f32 %v254, %v258
        %v260 = vpack.c.bf16 %v259, %v259
        %v277 = vunpack.c.l.b16 %v218
        %v278 = vunpack.c.l.b16 %v219
        %v279 = vunpack.c.l.b16 %v220
        %v280 = vunpack.c.l.b16 %v221
        %v281 = vunpack.c.l.b16 %v222
        %v282 = vunpack.c.l.b16 %v223
        %v283 = vunpack.c.l.b16 %v224
        %v284 = vunpack.c.l.b16 %v225
        %v285 = vunpack.c.l.b16 %v226
        %v286 = vunpack.c.l.b16 %v227
        %v287 = vunpack.c.l.b16 %v228
        %v288 = vunpack.c.l.b16 %v229
        %v289 = vunpack.c.l.b16 %v230
        %v290 = vunpack.c.l.b16 %v231
        %v291 = vunpack.c.l.b16 %v232
        %v292 = vunpack.c.l.b16 %v233
        %v293 = vpack.c.b16 %v278, %v277
        %v294 = vpack.c.b16 %v280, %v279
        %v295 = vpack.c.b16 %v282, %v281
        %v296 = vpack.c.b16 %v284, %v283
        %v297 = vpack.c.b16 %v286, %v285
        %v298 = vpack.c.b16 %v288, %v287
        %v299 = vpack.c.b16 %v290, %v289
        %v300 = vpack.c.b16 %v292, %v291
        %309 = vmatprep.subr.bf16.mxu0 0
        %310 = vmatpush1.bf16.msra.mxu0 %v300
        %311 = vmatprep.subr.bf16.mxu0 0
        %312 = vmatpush1.bf16.msra.mxu0 %v299
        %313 = vmatprep.subr.bf16.mxu0 0
        %314 = vmatpush1.bf16.msra.mxu0 %v298
        %315 = vmatprep.subr.bf16.mxu0 0
        %316 = vmatpush1.bf16.msra.mxu0 %v297
        %317 = vmatprep.subr.bf16.mxu0 0
        %318 = vmatpush1.bf16.msra.mxu0 %v296
        %319 = vmatprep.subr.bf16.mxu0 0
        %320 = vmatpush1.bf16.msra.mxu0 %v295
        %321 = vmatprep.subr.bf16.mxu0 0
        %322 = vmatpush1.bf16.msra.mxu0 %v294
        %323 = vmatprep.subr.bf16.mxu0 0
        %324 = vmatpush1.bf16.msra.mxu0 %v293
        %325 = vmatprep.subr.bf16.mxu0 0
        %326 = vmatpush2.bf16.msra.mxu0 0
        %327 = vmatprep.subr.bf16.mxu0 0
        %328 = vmatpush2.bf16.msra.mxu0 0
        %329 = vmatprep.subr.bf16.mxu0 0
        %330 = vmatpush2.bf16.msra.mxu0 0
        %331 = vmatprep.subr.bf16.mxu0 0
        %332 = vmatpush2.bf16.msra.mxu0 0
        %333 = vmatprep.subr.bf16.mxu0 0
        %334 = vmatpush2.bf16.msra.mxu0 0
        %335 = vmatprep.subr.bf16.mxu0 0
        %336 = vmatpush2.bf16.msra.mxu0 0
        %337 = vmatprep.subr.bf16.mxu0 0
        %338 = vmatpush2.bf16.msra.mxu0 0
        %339 = vmatprep.subr.bf16.mxu0 0
        %340 = vmatpush2.bf16.msra.mxu0 0
        %341 = vmatprep.mubr.bf16.mxu0 0
        %342 = vmatmul.mubr.bf16.gmra.mxu0 %v260
        %v343 = vpop.f32.mrf.mxu0
        %v344 = vadd.f32 0.0, %v343
        %v345 = vpop.f32.mrf.mxu0
        %v346 = vpop.f32.mrf.mxu0
        %v347 = vpop.f32.mrf.mxu0
        %348 = vdwg.mxu0
        %s349 = scalar_lea.vmem %s184, 8 [#allocation2]
        %v350 = vld [vmem:[%s349] sm:$0xff]
        %351 = vadd.xlane.f32.xlu0 %v350
        %v352 = vpop.xlane.xlu0 %351
        %v353 = vmul.f32 %v352, 0.0625
        %v354 = vsub.f32 %v350, %v353
        %v355 = vmul.f32 %v354, %v354
        %356 = vadd.xlane.f32.xlu0 %v355
        %v357 = vpop.xlane.xlu0 %356
        %v358 = vmul.f32 %v353, %v353
        %v359 = vmul.f32 %v358, 112.0
        %v360 = vsub.f32 %v357, %v359
        %v361 = vmax.f32 %v360, 0.0
        %v362 = vmul.f32 %v361, 0.0625
        %v363 = vadd.f32 %v362, 1e-05
        %v364 = vrsqrt.pop %v363
        %v365 = vmul.f32 %v354, %v364
        %v366 = vmul.f32 %v365, %v253
        %v367 = vadd.f32 %v366, %v258
        %v368 = vpack.c.bf16 %v367, %v367
        %369 = vmatprep.subr.bf16.mxu0 0
        %370 = vmatpush1.bf16.msra.mxu0 %v300
        %371 = vmatprep.subr.bf16.mxu0 0
        %372 = vmatpush1.bf16.msra.mxu0 %v299
        %373 = vmatprep.subr.bf16.mxu0 0
        %374 = vmatpush1.bf16.msra.mxu0 %v298
        %375 = vmatprep.subr.bf16.mxu0 0
        %376 = vmatpush1.bf16.msra.mxu0 %v297
        %377 = vmatprep.subr.bf16.mxu0 0
        %378 = vmatpush1.bf16.msra.mxu0 %v296
        %379 = vmatprep.subr.bf16.mxu0 0
        %380 = vmatpush1.bf16.msra.mxu0 %v295
        %381 = vmatprep.subr.bf16.mxu0 0
        %382 = vmatpush1.bf16.msra.mxu0 %v294
        %383 = vmatprep.subr.bf16.mxu0 0
        %384 = vmatpush1.bf16.msra.mxu0 %v293
        %385 = vmatprep.subr.bf16.mxu0 0
        %386 = vmatpush2.bf16.msra.mxu0 0
        %387 = vmatprep.subr.bf16.mxu0 0
        %388 = vmatpush2.bf16.msra.mxu0 0
        %389 = vmatprep.subr.bf16.mxu0 0
        %390 = vmatpush2.bf16.msra.mxu0 0
        %391 = vmatprep.subr.bf16.mxu0 0
        %392 = vmatpush2.bf16.msra.mxu0 0
        %393 = vmatprep.subr.bf16.mxu0 0
        %394 = vmatpush2.bf16.msra.mxu0 0
        %395 = vmatprep.subr.bf16.mxu0 0
        %396 = vmatpush2.bf16.msra.mxu0 0
        %397 = vmatprep.subr.bf16.mxu0 0
        %398 = vmatpush2.bf16.msra.mxu0 0
        %399 = vmatprep.subr.bf16.mxu0 0
        %400 = vmatpush2.bf16.msra.mxu0 0
        %401 = vmatprep.mubr.bf16.mxu0 0
        %402 = vmatmul.mubr.bf16.gmra.mxu0 %v368
        %v403 = vpop.f32.mrf.mxu0
        %v404 = vadd.f32 0.0, %v403
        %v405 = vpop.f32.mrf.mxu0
        %v406 = vpop.f32.mrf.mxu0
        %v407 = vpop.f32.mrf.mxu0
        %408 = vdwg.mxu0
        %v409 = vmax.f32 %v344, %v404
        %s410 = scalar_lea.vmem %s184, 16 [#allocation2]
        %v411 = vld [vmem:[%s410] sm:$0xff]
        %412 = vadd.xlane.f32.xlu0 %v411
        %v413 = vpop.xlane.xlu0 %412
        %v414 = vmul.f32 %v413, 0.0625
        %v415 = vsub.f32 %v411, %v414
        %v416 = vmul.f32 %v415, %v415
        %417 = vadd.xlane.f32.xlu0 %v416
        %v418 = vpop.xlane.xlu0 %417
        %v419 = vmul.f32 %v414, %v414
        %v420 = vmul.f32 %v419, 112.0
        %v421 = vsub.f32 %v418, %v420
        %v422 = vmax.f32 %v421, 0.0
        %v423 = vmul.f32 %v422, 0.0625
        %v424 = vadd.f32 %v423, 1e-05
        %v425 = vrsqrt.pop %v424
        %v426 = vmul.f32 %v415, %v425
        %v427 = vmul.f32 %v426, %v253
        %v428 = vadd.f32 %v427, %v258
        %v429 = vpack.c.bf16 %v428, %v428
        %430 = vmatprep.subr.bf16.mxu0 0
        %431 = vmatpush1.bf16.msra.mxu0 %v300
        %432 = vmatprep.subr.bf16.mxu0 0
        %433 = vmatpush1.bf16.msra.mxu0 %v299
        %434 = vmatprep.subr.bf16.mxu0 0
        %435 = vmatpush1.bf16.msra.mxu0 %v298
        %436 = vmatprep.subr.bf16.mxu0 0
        %437 = vmatpush1.bf16.msra.mxu0 %v297
        %438 = vmatprep.subr.bf16.mxu0 0
        %439 = vmatpush1.bf16.msra.mxu0 %v296
        %440 = vmatprep.subr.bf16.mxu0 0
        %441 = vmatpush1.bf16.msra.mxu0 %v295
        %442 = vmatprep.subr.bf16.mxu0 0
        %443 = vmatpush1.bf16.msra.mxu0 %v294
        %444 = vmatprep.subr.bf16.mxu0 0
        %445 = vmatpush1.bf16.msra.mxu0 %v293
        %446 = vmatprep.subr.bf16.mxu0 0
        %447 = vmatpush2.bf16.msra.mxu0 0
        %448 = vmatprep.subr.bf16.mxu0 0
        %449 = vmatpush2.bf16.msra.mxu0 0
        %450 = vmatprep.subr.bf16.mxu0 0
        %451 = vmatpush2.bf16.msra.mxu0 0
        %452 = vmatprep.subr.bf16.mxu0 0
        %453 = vmatpush2.bf16.msra.mxu0 0
        %454 = vmatprep.subr.bf16.mxu0 0
        %455 = vmatpush2.bf16.msra.mxu0 0
        %456 = vmatprep.subr.bf16.mxu0 0
        %457 = vmatpush2.bf16.msra.mxu0 0
        %458 = vmatprep.subr.bf16.mxu0 0
        %459 = vmatpush2.bf16.msra.mxu0 0
        %460 = vmatprep.subr.bf16.mxu0 0
        %461 = vmatpush2.bf16.msra.mxu0 0
        %462 = vmatprep.mubr.bf16.mxu0 0
        %463 = vmatmul.mubr.bf16.gmra.mxu0 %v429
        %v464 = vpop.f32.mrf.mxu0
        %v465 = vadd.f32 0.0, %v464
        %v466 = vpop.f32.mrf.mxu0
        %v467 = vpop.f32.mrf.mxu0
        %v468 = vpop.f32.mrf.mxu0
        %469 = vdwg.mxu0
        %v470 = vmax.f32 %v409, %v465
        %s471 = scalar_lea.vmem %s184, 24 [#allocation2]
        %v472 = vld [vmem:[%s471] sm:$0xff]
        %473 = vadd.xlane.f32.xlu0 %v472
        %v474 = vpop.xlane.xlu0 %473
        %v475 = vmul.f32 %v474, 0.0625
        %v476 = vsub.f32 %v472, %v475
        %v477 = vmul.f32 %v476, %v476
        %478 = vadd.xlane.f32.xlu0 %v477
        %v479 = vpop.xlane.xlu0 %478
        %v480 = vmul.f32 %v475, %v475
        %v481 = vmul.f32 %v480, 112.0
        %v482 = vsub.f32 %v479, %v481
        %v483 = vmax.f32 %v482, 0.0
        %v484 = vmul.f32 %v483, 0.0625
        %v485 = vadd.f32 %v484, 1e-05
        %v486 = vrsqrt.pop %v485
        %v487 = vmul.f32 %v476, %v486
        %v488 = vmul.f32 %v487, %v253
        %v489 = vadd.f32 %v488, %v258
        %v490 = vpack.c.bf16 %v489, %v489
        %491 = vmatprep.subr.bf16.mxu0 0
        %492 = vmatpush1.bf16.msra.mxu0 %v300
        %493 = vmatprep.subr.bf16.mxu0 0
        %494 = vmatpush1.bf16.msra.mxu0 %v299
        %495 = vmatprep.subr.bf16.mxu0 0
        %496 = vmatpush1.bf16.msra.mxu0 %v298
        %497 = vmatprep.subr.bf16.mxu0 0
        %498 = vmatpush1.bf16.msra.mxu0 %v297
        %499 = vmatprep.subr.bf16.mxu0 0
        %500 = vmatpush1.bf16.msra.mxu0 %v296
        %501 = vmatprep.subr.bf16.mxu0 0
        %502 = vmatpush1.bf16.msra.mxu0 %v295
        %503 = vmatprep.subr.bf16.mxu0 0
        %504 = vmatpush1.bf16.msra.mxu0 %v294
        %505 = vmatprep.subr.bf16.mxu0 0
        %506 = vmatpush1.bf16.msra.mxu0 %v293
        %507 = vmatprep.subr.bf16.mxu0 0
        %508 = vmatpush2.bf16.msra.mxu0 0
        %509 = vmatprep.subr.bf16.mxu0 0
        %510 = vmatpush2.bf16.msra.mxu0 0
        %511 = vmatprep.subr.bf16.mxu0 0
        %512 = vmatpush2.bf16.msra.mxu0 0
        %513 = vmatprep.subr.bf16.mxu0 0
        %514 = vmatpush2.bf16.msra.mxu0 0
        %515 = vmatprep.subr.bf16.mxu0 0
        %516 = vmatpush2.bf16.msra.mxu0 0
        %517 = vmatprep.subr.bf16.mxu0 0
        %518 = vmatpush2.bf16.msra.mxu0 0
        %519 = vmatprep.subr.bf16.mxu0 0
        %520 = vmatpush2.bf16.msra.mxu0 0
        %521 = vmatprep.subr.bf16.mxu0 0
        %522 = vmatpush2.bf16.msra.mxu0 0
        %523 = vmatprep.mubr.bf16.mxu0 0
        %524 = vmatmul.mubr.bf16.gmra.mxu0 %v490
        %v525 = vpop.f32.mrf.mxu0
        %v526 = vadd.f32 0.0, %v525
        %v527 = vpop.f32.mrf.mxu0
        %v528 = vpop.f32.mrf.mxu0
        %v529 = vpop.f32.mrf.mxu0
        %530 = vdwg.mxu0
        %v531 = vmax.f32 %v470, %v526
        %532 = vst [vmem:[%s214] sm:$0xff] %v531
        %s533 = sand.u32 %s97, 1
        %s534 = scalar_lea.sflag [#allocation4], %s533
        %s535 = sand.u32 %s97, 1
        %s536 = smul.addr %s535, 8
        %s537 = scalar_lea.vmem [#allocation8], %s536
        // Predicated region
        $region45: #{tpu_custom_call.1} parent=31 // pred_check
          %p538 = pneg %p107
        $region46: #{tpu_custom_call.1} parent=31 // pred_check_branch
          %540 = sbr.rel (%p538) target = $region48
        $region47: #{tpu_custom_call.1} parent=31 // pred_region
          %s542 = ssub.s32 128, 128
          %543 = vsyncadd %s534, %s542
          %s544 = smul.addr %s21, 128
          %s545 = scalar_lea.hbm %s3, %s544
          %s547 = sshll.u32 %s537, 4
          %s548 = int_to_ptr.vmem [resolvable:$true] %s547
          %550 = dma.vmem_to_hbm [thread:$0]  %s548, 128, %s545, %s534
        $region48: #{tpu_custom_call.1} parent=31 // pred_fallthru
          _
      $region32: #{tpu_custom_call.1} parent=5 // pred_fallthru
        _
      %p551 = scmp.le.s32.totalorder 2, %s16
      // Predicated region
      $region49: #{tpu_custom_call.1} parent=5 // pred_check
        %p552 = pneg %p551
      $region50: #{tpu_custom_call.1} parent=5 // pred_check_branch
        %554 = sbr.rel (%p552) target = $region52
      $region51: #{tpu_custom_call.1} parent=5 // pred_region
        %s555 = ssub.s32 %s16, 2
        // Predicated region
        $region53: #{tpu_custom_call.1} parent=51 // pred_check
          %p556 = pneg %p113
        $region54: #{tpu_custom_call.1} parent=51 // pred_check_branch
          %558 = sbr.rel (%p556) target = $region56
        $region55: #{tpu_custom_call.1} parent=51 // pred_region
          %s559 = sand.u32 %s98, 1
          %s560 = scalar_lea.sflag [#allocation4], %s559
          %s561 = sand.u32 %s98, 1
          %s562 = smul.addr %s561, 8
          %s563 = scalar_lea.vmem [#allocation8], %s562
          %564 = dma.done %s560, 128
        $region56: #{tpu_custom_call.1} parent=51 // pred_fallthru
          _
      $region52: #{tpu_custom_call.1} parent=5 // pred_fallthru
        _
    $region6: #{tpu_custom_call.1} parent=1 // loop_footer
      %s20 = sadd.s32 1, %s16
    $region7: #{tpu_custom_call.1} parent=1 // loop_footer_branch
      %15 = sbr.rel target = $region3
    $region8: #{tpu_custom_call.1} parent=1 // loop_exit
      _
    %565 = vsyncpa [#allocation3], 1
    %s566 = scalar_lea.sflag [#allocation3], 1
    %567 = vsyncpa %s566, 1
    %568 = vsyncpa [#allocation6], 1
    %569 = vsyncpa [#allocation4], 1
    %s570 = scalar_lea.sflag [#allocation4], 1
    %571 = vsyncpa %s570, 1

// kernel: tpu_custom_call.1
$region0: #{tpu_custom_call.1}
  #allocation0 [shape = 'u32[]', space=smem, size = 0x4, offset = 0x4, fixed_abs, tag = 'smem constant byte address 0x4 - core index']
  #allocation1 [shape = 'u32[144,128]{1,0:T(1,128)}', space=vmem, size = 0x12000, scoped, tag = 'internal scratch']
  %s0 = inlined_call_operand.hbm [shape: f32[4,16,128], index: 0, kind: input, shape index: {}]
  %s1 = inlined_call_operand.hbm [shape: f32[2,128], index: 1, kind: input, shape index: {}]
  %s2 = inlined_call_operand.hbm [shape: bf16[128,128], index: 2, kind: input, shape index: {}]
  %s3 = inlined_call_operand.hbm [shape: f32[16,128], index: 3, kind: output, shape index: {}]
  %s4 = sld [smem:[#allocation0]]
  $region57: #{tpu_custom_call.1} parent=0
    _
  %s6 = ssub.s32 1, %s4
  %s7 = scalar_select 0, %s6, %s4
  $region1: #{tpu_custom_call.1} parent=0
    #allocation2 [shape = 'u8[32768]{0}', space=vmem, size = 0x8000, scoped, tag = 'input window, operand 0']
    #allocation3 [shape = 's32[2]{0}', space=sflag, size = 0x8, scoped, tag = 'scoped memory for tpu_custom_call.1']
    #allocation4 [shape = 's32[2]{0}', space=sflag, size = 0x8, scoped, tag = 'scoped memory for tpu_custom_call.1']
    #allocation5 [shape = 'u8[1024]{0}', space=vmem, size = 0x400, scoped, tag = 'input window, operand 1, single buffered']
    #allocation6 [shape = 's32[1]{0}', space=sflag, size = 0x4, scoped, tag = 'scoped memory for tpu_custom_call.1']
    #allocation7 [shape = 'u8[32768]{0}', space=vmem, size = 0x8000, scoped, tag = 'input window, operand 2, single buffered']
    #allocation8 [shape = 'u8[8192]{0}', space=vmem, size = 0x2000, scoped, tag = 'output window, operand 0']
    %8 = vsyncpa [#allocation3], 0
    %s9 = scalar_lea.sflag [#allocation3], 1
    %10 = vsyncpa %s9, 0
    %11 = vsyncpa [#allocation6], 0
    %12 = vsyncpa [#allocation4], 0
    %s13 = scalar_lea.sflag [#allocation4], 1
    %14 = vsyncpa %s13, 0
    loop: start=0, step=1, limit=4
    $region2: #{tpu_custom_call.1} parent=1 // loop_pre_header
      _
    $region3: #{tpu_custom_call.1} parent=1 // loop_header
      %s16 = sphi 0, %s20
      %p17 = scmp.ge.s32.totalorder %s16, 4
      %s26 = sphi 0, %s28
      %s29 = sphi 0, %s26
      %s30 = sphi 0, %s29
      %s46 = sphi 0, %s30
      %s50 = sphi 0, %s50
      %s52 = sphi 0, %s50
      %s53 = sphi 0, %s52
      %s67 = sphi 0, %s53
      %s71 = sphi 0, %s71
      %s73 = sphi 0, %s71
      %s74 = sphi 0, %s73
      %s88 = sphi 0, %s74
      %s94 = sphi 0, %s96
      %s97 = sphi 0, %s94
      %s98 = sphi 0, %s97
      %s114 = sphi 0, %s98
    $region4: #{tpu_custom_call.1} parent=1 // loop_header_branch
      %19 = sbr.rel (%p17) target = $region8
    $region5: #{tpu_custom_call.1} parent=1 // loop_body
      %s21 = ssub.s32 %s16, 1
      %s22 = ssub.s32 %s16, 2
      %s23 = sadd.s32 %s16, 1
      %s24 = ssub.s32 %s16, %s23
      %p25 = scmp.eq.s32.totalorder %s24, 0
      %s27 = sadd.s32 %s26, 1
      %s28 = scalar_select %p25, %s26, %s27
      %p31 = pneg %p25
      %p32 = scmp.eq.s32.totalorder %s16, 1
      %p33 = por %p31, %p32
      %p34 = scmp.ne.s32.totalorder %s26, %s29
      %p35 = scmp.eq.s32.totalorder %s16, 0
      %p36 = por %p34, %p35
      %p37 = scmp.ne.s32.totalorder %s26, %s29
      %p38 = scmp.eq.s32.totalorder %s21, 1
      %p39 = por %p37, %p38
      %p40 = scmp.ne.s32.totalorder %s29, %s30
      %p41 = scmp.eq.s32.totalorder %s21, 0
      %p42 = por %p40, %p41
      %p43 = scmp.ne.s32.totalorder %s29, %s30
      %p44 = scmp.eq.s32.totalorder %s22, 1
      %p45 = por %p43, %p44
      %p47 = scmp.ne.s32.totalorder %s30, %s46
      %p48 = scmp.eq.s32.totalorder %s22, 0
      %p49 = por %p47, %p48
      %s51 = sadd.s32 %s50, 1
      %p54 = scmp.eq.s32.totalorder %s16, 1
      %p55 = scmp.ne.s32.totalorder %s50, %s52
      %p56 = scmp.eq.s32.totalorder %s16, 0
      %p57 = por %p55, %p56
      %p58 = scmp.ne.s32.totalorder %s50, %s52
      %p59 = scmp.eq.s32.totalorder %s21, 1
      %p60 = por %p58, %p59
      %p61 = scmp.ne.s32.totalorder %s52, %s53
      %p62 = scmp.eq.s32.totalorder %s21, 0
      %p63 = por %p61, %p62
      %p64 = scmp.ne.s32.totalorder %s52, %s53
      %p65 = scmp.eq.s32.totalorder %s22, 1
      %p66 = por %p64, %p65
      %p68 = scmp.ne.s32.totalorder %s53, %s67
      %p69 = scmp.eq.s32.totalorder %s22, 0
      %p70 = por %p68, %p69
      %s72 = sadd.s32 %s71, 1
      %p75 = scmp.eq.s32.totalorder %s16, 1
      %p76 = scmp.ne.s32.totalorder %s71, %s73
      %p77 = scmp.eq.s32.totalorder %s16, 0
      %p78 = por %p76, %p77
      %p79 = scmp.ne.s32.totalorder %s71, %s73
      %p80 = scmp.eq.s32.totalorder %s21, 1
      %p81 = por %p79, %p80
      %p82 = scmp.ne.s32.totalorder %s73, %s74
      %p83 = scmp.eq.s32.totalorder %s21, 0
      %p84 = por %p82, %p83
      %p85 = scmp.ne.s32.totalorder %s73, %s74
      %p86 = scmp.eq.s32.totalorder %s22, 1
      %p87 = por %p85, %p86
      %p89 = scmp.ne.s32.totalorder %s74, %s88
      %p90 = scmp.eq.s32.totalorder %s22, 0
      %p91 = por %p89, %p90
      %s92 = ssub.s32 %s16, %s23
      %p93 = scmp.eq.s32.totalorder %s92, 0
      %s95 = sadd.s32 %s94, 1
      %s96 = scalar_select %p93, %s94, %s95
      %p99 = pneg %p93
      %p100 = scmp.eq.s32.totalorder %s16, 1
      %p101 = por %p99, %p100
      %p102 = scmp.ne.s32.totalorder %s94, %s97
      %p103 = scmp.eq.s32.totalorder %s16, 0
      %p104 = por %p102, %p103
      %p105 = scmp.ne.s32.totalorder %s94, %s97
      %p106 = scmp.eq.s32.totalorder %s21, 1
      %p107 = por %p105, %p106
      %p108 = scmp.ne.s32.totalorder %s97, %s98
      %p109 = scmp.eq.s32.totalorder %s21, 0
      %p110 = por %p108, %p109
      %p111 = scmp.ne.s32.totalorder %s97, %s98
      %p112 = scmp.eq.s32.totalorder %s22, 1
      %p113 = por %p111, %p112
      %p115 = scmp.ne.s32.totalorder %s98, %s114
      %p116 = scmp.eq.s32.totalorder %s22, 0
      %p117 = por %p115, %p116
      %p118 = scmp.le.s32.totalorder 1, %s16
      %p119 = scmp.lt.s32.totalorder %s16, 3
      %p120 = pnand %p118, %p119
      %p121 = pneg %p120
      // Predicated region
      $region9: #{tpu_custom_call.1} parent=5 // pred_check
        _
      $region10: #{tpu_custom_call.1} parent=5 // pred_check_branch
        %123 = sbr.rel (%p120) target = $region12
      $region11: #{tpu_custom_call.1} parent=5 // pred_region
        %s124 = ssub.s32 %s16, 1
        // Predicated region
        $region13: #{tpu_custom_call.1} parent=11 // pred_check
          %p125 = pneg %p63
        $region14: #{tpu_custom_call.1} parent=11 // pred_check_branch
          %127 = sbr.rel (%p125) target = $region16
        $region15: #{tpu_custom_call.1} parent=11 // pred_region
          %s129 = ssub.s32 32, 32
          %130 = vsyncadd [#allocation6], %s129
          %s132 = sshll.u32 [#allocation5], 4
          %s133 = int_to_ptr.vmem [resolvable:$true] %s132
          %135 = dma.hbm_to_vmem [thread:$0]  %s1, 32, %s133, [#allocation6]
        $region16: #{tpu_custom_call.1} parent=11 // pred_fallthru
          _
        // Predicated region
        $region17: #{tpu_custom_call.1} parent=11 // pred_check
          %p136 = pneg %p84
        $region18: #{tpu_custom_call.1} parent=11 // pred_check_branch
          %138 = sbr.rel (%p136) target = $region20
        $region19: #{tpu_custom_call.1} parent=11 // pred_region
          %s140 = ssub.s32 1024, 1024
          %141 = vsyncadd [#allocation6], %s140
          %s142 = sshll.u32 [#allocation7], 4
          %s143 = int_to_ptr.vmem [resolvable:$true] %s142
          %148 = dma.hbm_to_vmem [thread:$0]  %s2, 1024, %s143, [#allocation6], 64, 64, 4
        $region20: #{tpu_custom_call.1} parent=11 // pred_fallthru
          _
      $region12: #{tpu_custom_call.1} parent=5 // pred_fallthru
        _
      %p149 = scmp.lt.s32.totalorder %s16, 2
      // Predicated region
      $region21: #{tpu_custom_call.1} parent=5 // pred_check
        %p150 = pneg %p149
      $region22: #{tpu_custom_call.1} parent=5 // pred_check_branch
        %152 = sbr.rel (%p150) target = $region24
      $region23: #{tpu_custom_call.1} parent=5 // pred_region
        // Predicated region
        $region25: #{tpu_custom_call.1} parent=23 // pred_check
          %p153 = pneg %p36
        $region26: #{tpu_custom_call.1} parent=23 // pred_check_branch
          %155 = sbr.rel (%p153) target = $region28
        $region27: #{tpu_custom_call.1} parent=23 // pred_region
          %s156 = sand.u32 %s26, 1
          %s157 = scalar_lea.sflag [#allocation3], %s156
          %s158 = sand.u32 %s26, 1
          %s159 = smul.addr %s158, 32
          %s160 = scalar_lea.vmem [#allocation2], %s159
          %s162 = ssub.s32 512, 512
          %163 = vsyncadd %s157, %s162
          %s164 = smul.addr %s16, 128
          %s165 = scalar_lea.hbm %s0, %s164
          %s166 = sshll.u32 %s160, 4
          %s167 = int_to_ptr.vmem [resolvable:$true] %s166
          %172 = dma.hbm_to_vmem [thread:$0]  %s165, 512, %s167, %s157, 256, 128, 8
        $region28: #{tpu_custom_call.1} parent=23 // pred_fallthru
          _
      $region24: #{tpu_custom_call.1} parent=5 // pred_fallthru
        _
      %p173 = scmp.le.s32.totalorder 1, %s16
      %p174 = scmp.lt.s32.totalorder %s16, 3
      %p175 = pnand %p173, %p174
      %p176 = pneg %p175
      // Predicated region
      $region29: #{tpu_custom_call.1} parent=5 // pred_check
        _
      $region30: #{tpu_custom_call.1} parent=5 // pred_check_branch
        %178 = sbr.rel (%p175) target = $region32
      $region31: #{tpu_custom_call.1} parent=5 // pred_region
        %s179 = ssub.s32 %s16, 1
        %s180 = sand.u32 %s29, 1
        %s181 = scalar_lea.sflag [#allocation3], %s180
        %s182 = sand.u32 %s29, 1
        %s183 = smul.addr %s182, 32
        %s184 = scalar_lea.vmem [#allocation2], %s183
        // Predicated region
        $region33: #{tpu_custom_call.1} parent=31 // pred_check
          %p185 = pneg %p42
        $region34: #{tpu_custom_call.1} parent=31 // pred_check_branch
          %187 = sbr.rel (%p185) target = $region36
        $region35: #{tpu_custom_call.1} parent=31 // pred_region
          %188 = dma.done %s181, 512
        $region36: #{tpu_custom_call.1} parent=31 // pred_fallthru
          _
        // Predicated region
        $region37: #{tpu_custom_call.1} parent=31 // pred_check
          %p189 = pneg %p63
        $region38: #{tpu_custom_call.1} parent=31 // pred_check_branch
          %191 = sbr.rel (%p189) target = $region40
        $region39: #{tpu_custom_call.1} parent=31 // pred_region
          %192 = dma.done [#allocation6], 32
        $region40: #{tpu_custom_call.1} parent=31 // pred_fallthru
          _
        // Predicated region
        $region41: #{tpu_custom_call.1} parent=31 // pred_check
          %p193 = pneg %p84
        $region42: #{tpu_custom_call.1} parent=31 // pred_check_branch
          %195 = sbr.rel (%p193) target = $region44
        $region43: #{tpu_custom_call.1} parent=31 // pred_region
          %196 = dma.done [#allocation6], 1024
        $region44: #{tpu_custom_call.1} parent=31 // pred_fallthru
          _
        %s197 = sand.u32 %s29, 1
        %s198 = scalar_lea.sflag [#allocation3], %s197
        %s199 = sand.u32 %s29, 1
        %s200 = smul.addr %s199, 32
        %s201 = scalar_lea.vmem [#allocation2], %s200
        %p202 = pneg %p42
        %p203 = pneg %p39
        %p204 = pneg %p63
        %p205 = pneg %p60
        %p206 = pneg %p84
        %p207 = pneg %p81
        %p208 = pneg %p110
        %p209 = pneg %p107
        %s210 = sand.u32 %s97, 1
        %s211 = scalar_lea.sflag [#allocation4], %s210
        %s212 = sand.u32 %s97, 1
        %s213 = smul.addr %s212, 8
        %s214 = scalar_lea.vmem [#allocation8], %s213
        %v216 = vld [vmem:[#allocation5] sm:$0x1]
        %v217 = vld [vmem:[#allocation5 + $0x1] sm:$0x1]
        %v218 = vld [vmem:[#allocation7] sm:$0xf]
        %v219 = vld [vmem:[#allocation7 + $0x4] sm:$0xf]
        %v220 = vld [vmem:[#allocation7 + $0x8] sm:$0xf]
        %v221 = vld [vmem:[#allocation7 + $0xc] sm:$0xf]
        %v222 = vld [vmem:[#allocation7 + $0x10] sm:$0xf]
        %v223 = vld [vmem:[#allocation7 + $0x14] sm:$0xf]
        %v224 = vld [vmem:[#allocation7 + $0x18] sm:$0xf]
        %v225 = vld [vmem:[#allocation7 + $0x1c] sm:$0xf]
        %v226 = vld [vmem:[#allocation7 + $0x20] sm:$0xf]
        %v227 = vld [vmem:[#allocation7 + $0x24] sm:$0xf]
        %v228 = vld [vmem:[#allocation7 + $0x28] sm:$0xf]
        %v229 = vld [vmem:[#allocation7 + $0x2c] sm:$0xf]
        %v230 = vld [vmem:[#allocation7 + $0x30] sm:$0xf]
        %v231 = vld [vmem:[#allocation7 + $0x34] sm:$0xf]
        %v232 = vld [vmem:[#allocation7 + $0x38] sm:$0xf]
        %v233 = vld [vmem:[#allocation7 + $0x3c] sm:$0xf]
        %v234 = vld [vmem:[%s184] sm:$0xff]
        %235 = vadd.xlane.f32.xlu0 %v234
        %v236 = vpop.xlane.xlu0 %235
        %v237 = vmul.f32 %v236, 0.0625
        %v238 = vsub.f32 %v234, %v237
        %v239 = vmul.f32 %v238, %v238
        %240 = vadd.xlane.f32.xlu0 %v239
        %v241 = vpop.xlane.xlu0 %240
        %v242 = vmul.f32 %v237, %v237
        %v243 = vmul.f32 %v242, 112.0
        %v244 = vsub.f32 %v241, %v243
        %v245 = vmax.f32 %v244, 0.0
        %v246 = vmul.f32 %v245, 0.0625
        %v247 = vadd.f32 %v246, 1e-05
        %v248 = vrsqrt.pop %v247
        %v249 = vmul.f32 %v238, %v248
        %v250 = vlaneseq
        %v251 = vshrl.u32 %v250, 7
        %v252 = vsub.s32 0, %v251
        %v253 = vrot.slane %v216, %v252
        %v254 = vmul.f32 %v249, %v253
        %v255 = vlaneseq
        %v256 = vshrl.u32 %v255, 7
        %v257 = vsub.s32 0, %v256
        %v258 = vrot.slane %v217, %v257
        %v259 = vadd.f32 %v254, %v258
        %v260 = vpack.c.bf16 %v259, %v259
        %v277 = vunpack.c.l.b16 %v218
        %v278 = vunpack.c.l.b16 %v219
        %v279 = vunpack.c.l.b16 %v220
        %v280 = vunpack.c.l.b16 %v221
        %v281 = vunpack.c.l.b16 %v222
        %v282 = vunpack.c.l.b16 %v223
        %v283 = vunpack.c.l.b16 %v224
        %v284 = vunpack.c.l.b16 %v225
        %v285 = vunpack.c.l.b16 %v226
        %v286 = vunpack.c.l.b16 %v227
        %v287 = vunpack.c.l.b16 %v228
        %v288 = vunpack.c.l.b16 %v229
        %v289 = vunpack.c.l.b16 %v230
        %v290 = vunpack.c.l.b16 %v231
        %v291 = vunpack.c.l.b16 %v232
        %v292 = vunpack.c.l.b16 %v233
        %v293 = vpack.c.b16 %v278, %v277
        %v294 = vpack.c.b16 %v280, %v279
        %v295 = vpack.c.b16 %v282, %v281
        %v296 = vpack.c.b16 %v284, %v283
        %v297 = vpack.c.b16 %v286, %v285
        %v298 = vpack.c.b16 %v288, %v287
        %v299 = vpack.c.b16 %v290, %v289
        %v300 = vpack.c.b16 %v292, %v291
        %309 = vmatprep.subr.bf16.mxu0 0
        %310 = vmatpush1.bf16.msra.mxu0 %v300
        %311 = vmatprep.subr.bf16.mxu0 0
        %312 = vmatpush1.bf16.msra.mxu0 %v299
        %313 = vmatprep.subr.bf16.mxu0 0
        %314 = vmatpush1.bf16.msra.mxu0 %v298
        %315 = vmatprep.subr.bf16.mxu0 0
        %316 = vmatpush1.bf16.msra.mxu0 %v297
        %317 = vmatprep.subr.bf16.mxu0 0
        %318 = vmatpush1.bf16.msra.mxu0 %v296
        %319 = vmatprep.subr.bf16.mxu0 0
        %320 = vmatpush1.bf16.msra.mxu0 %v295
        %321 = vmatprep.subr.bf16.mxu0 0
        %322 = vmatpush1.bf16.msra.mxu0 %v294
        %323 = vmatprep.subr.bf16.mxu0 0
        %324 = vmatpush1.bf16.msra.mxu0 %v293
        %325 = vmatprep.subr.bf16.mxu0 0
        %326 = vmatpush2.bf16.msra.mxu0 0
        %327 = vmatprep.subr.bf16.mxu0 0
        %328 = vmatpush2.bf16.msra.mxu0 0
        %329 = vmatprep.subr.bf16.mxu0 0
        %330 = vmatpush2.bf16.msra.mxu0 0
        %331 = vmatprep.subr.bf16.mxu0 0
        %332 = vmatpush2.bf16.msra.mxu0 0
        %333 = vmatprep.subr.bf16.mxu0 0
        %334 = vmatpush2.bf16.msra.mxu0 0
        %335 = vmatprep.subr.bf16.mxu0 0
        %336 = vmatpush2.bf16.msra.mxu0 0
        %337 = vmatprep.subr.bf16.mxu0 0
        %338 = vmatpush2.bf16.msra.mxu0 0
        %339 = vmatprep.subr.bf16.mxu0 0
        %340 = vmatpush2.bf16.msra.mxu0 0
        %341 = vmatprep.mubr.bf16.mxu0 0
        %342 = vmatmul.mubr.bf16.gmra.mxu0 %v260
        %v343 = vpop.f32.mrf.mxu0
        %v344 = vadd.f32 0.0, %v343
        %v345 = vpop.f32.mrf.mxu0
        %v346 = vpop.f32.mrf.mxu0
        %v347 = vpop.f32.mrf.mxu0
        %348 = vdwg.mxu0
        %s349 = scalar_lea.vmem %s184, 8 [#allocation2]
        %v350 = vld [vmem:[%s349] sm:$0xff]
        %351 = vadd.xlane.f32.xlu0 %v350
        %v352 = vpop.xlane.xlu0 %351
        %v353 = vmul.f32 %v352, 0.0625
        %v354 = vsub.f32 %v350, %v353
        %v355 = vmul.f32 %v354, %v354
        %356 = vadd.xlane.f32.xlu0 %v355
        %v357 = vpop.xlane.xlu0 %356
        %v358 = vmul.f32 %v353, %v353
        %v359 = vmul.f32 %v358, 112.0
        %v360 = vsub.f32 %v357, %v359
        %v361 = vmax.f32 %v360, 0.0
        %v362 = vmul.f32 %v361, 0.0625
        %v363 = vadd.f32 %v362, 1e-05
        %v364 = vrsqrt.pop %v363
        %v365 = vmul.f32 %v354, %v364
        %v366 = vmul.f32 %v365, %v253
        %v367 = vadd.f32 %v366, %v258
        %v368 = vpack.c.bf16 %v367, %v367
        %369 = vmatprep.subr.bf16.mxu0 0
        %370 = vmatpush1.bf16.msra.mxu0 %v300
        %371 = vmatprep.subr.bf16.mxu0 0
        %372 = vmatpush1.bf16.msra.mxu0 %v299
        %373 = vmatprep.subr.bf16.mxu0 0
        %374 = vmatpush1.bf16.msra.mxu0 %v298
        %375 = vmatprep.subr.bf16.mxu0 0
        %376 = vmatpush1.bf16.msra.mxu0 %v297
        %377 = vmatprep.subr.bf16.mxu0 0
        %378 = vmatpush1.bf16.msra.mxu0 %v296
        %379 = vmatprep.subr.bf16.mxu0 0
        %380 = vmatpush1.bf16.msra.mxu0 %v295
        %381 = vmatprep.subr.bf16.mxu0 0
        %382 = vmatpush1.bf16.msra.mxu0 %v294
        %383 = vmatprep.subr.bf16.mxu0 0
        %384 = vmatpush1.bf16.msra.mxu0 %v293
        %385 = vmatprep.subr.bf16.mxu0 0
        %386 = vmatpush2.bf16.msra.mxu0 0
        %387 = vmatprep.subr.bf16.mxu0 0
        %388 = vmatpush2.bf16.msra.mxu0 0
        %389 = vmatprep.subr.bf16.mxu0 0
        %390 = vmatpush2.bf16.msra.mxu0 0
        %391 = vmatprep.subr.bf16.mxu0 0
        %392 = vmatpush2.bf16.msra.mxu0 0
        %393 = vmatprep.subr.bf16.mxu0 0
        %394 = vmatpush2.bf16.msra.mxu0 0
        %395 = vmatprep.subr.bf16.mxu0 0
        %396 = vmatpush2.bf16.msra.mxu0 0
        %397 = vmatprep.subr.bf16.mxu0 0
        %398 = vmatpush2.bf16.msra.mxu0 0
        %399 = vmatprep.subr.bf16.mxu0 0
        %400 = vmatpush2.bf16.msra.mxu0 0
        %401 = vmatprep.mubr.bf16.mxu0 0
        %402 = vmatmul.mubr.bf16.gmra.mxu0 %v368
        %v403 = vpop.f32.mrf.mxu0
        %v404 = vadd.f32 0.0, %v403
        %v405 = vpop.f32.mrf.mxu0
        %v406 = vpop.f32.mrf.mxu0
        %v407 = vpop.f32.mrf.mxu0
        %408 = vdwg.mxu0
        %v409 = vmax.f32 %v344, %v404
        %s410 = scalar_lea.vmem %s184, 16 [#allocation2]
        %v411 = vld [vmem:[%s410] sm:$0xff]
        %412 = vadd.xlane.f32.xlu0 %v411
        %v413 = vpop.xlane.xlu0 %412
        %v414 = vmul.f32 %v413, 0.0625
        %v415 = vsub.f32 %v411, %v414
        %v416 = vmul.f32 %v415, %v415
        %417 = vadd.xlane.f32.xlu0 %v416
        %v418 = vpop.xlane.xlu0 %417
        %v419 = vmul.f32 %v414, %v414
        %v420 = vmul.f32 %v419, 112.0
        %v421 = vsub.f32 %v418, %v420
        %v422 = vmax.f32 %v421, 0.0
        %v423 = vmul.f32 %v422, 0.0625
        %v424 = vadd.f32 %v423, 1e-05
        %v425 = vrsqrt.pop %v424
        %v426 = vmul.f32 %v415, %v425
        %v427 = vmul.f32 %v426, %v253
        %v428 = vadd.f32 %v427, %v258
        %v429 = vpack.c.bf16 %v428, %v428
        %430 = vmatprep.subr.bf16.mxu0 0
        %431 = vmatpush1.bf16.msra.mxu0 %v300
        %432 = vmatprep.subr.bf16.mxu0 0
        %433 = vmatpush1.bf16.msra.mxu0 %v299
        %434 = vmatprep.subr.bf16.mxu0 0
        %435 = vmatpush1.bf16.msra.mxu0 %v298
        %436 = vmatprep.subr.bf16.mxu0 0
        %437 = vmatpush1.bf16.msra.mxu0 %v297
        %438 = vmatprep.subr.bf16.mxu0 0
        %439 = vmatpush1.bf16.msra.mxu0 %v296
        %440 = vmatprep.subr.bf16.mxu0 0
        %441 = vmatpush1.bf16.msra.mxu0 %v295
        %442 = vmatprep.subr.bf16.mxu0 0
        %443 = vmatpush1.bf16.msra.mxu0 %v294
        %444 = vmatprep.subr.bf16.mxu0 0
        %445 = vmatpush1.bf16.msra.mxu0 %v293
        %446 = vmatprep.subr.bf16.mxu0 0
        %447 = vmatpush2.bf16.msra.mxu0 0
        %448 = vmatprep.subr.bf16.mxu0 0
        %449 = vmatpush2.bf16.msra.mxu0 0
        %450 = vmatprep.subr.bf16.mxu0 0
        %451 = vmatpush2.bf16.msra.mxu0 0
        %452 = vmatprep.subr.bf16.mxu0 0
        %453 = vmatpush2.bf16.msra.mxu0 0
        %454 = vmatprep.subr.bf16.mxu0 0
        %455 = vmatpush2.bf16.msra.mxu0 0
        %456 = vmatprep.subr.bf16.mxu0 0
        %457 = vmatpush2.bf16.msra.mxu0 0
        %458 = vmatprep.subr.bf16.mxu0 0
        %459 = vmatpush2.bf16.msra.mxu0 0
        %460 = vmatprep.subr.bf16.mxu0 0
        %461 = vmatpush2.bf16.msra.mxu0 0
        %462 = vmatprep.mubr.bf16.mxu0 0
        %463 = vmatmul.mubr.bf16.gmra.mxu0 %v429
        %v464 = vpop.f32.mrf.mxu0
        %v465 = vadd.f32 0.0, %v464
        %v466 = vpop.f32.mrf.mxu0
        %v467 = vpop.f32.mrf.mxu0
        %v468 = vpop.f32.mrf.mxu0
        %469 = vdwg.mxu0
        %v470 = vmax.f32 %v409, %v465
        %s471 = scalar_lea.vmem %s184, 24 [#allocation2]
        %v472 = vld [vmem:[%s471] sm:$0xff]
        %473 = vadd.xlane.f32.xlu0 %v472
        %v474 = vpop.xlane.xlu0 %473
        %v475 = vmul.f32 %v474, 0.0625
        %v476 = vsub.f32 %v472, %v475
        %v477 = vmul.f32 %v476, %v476
        %478 = vadd.xlane.f32.xlu0 %v477
        %v479 = vpop.xlane.xlu0 %478
        %v480 = vmul.f32 %v475, %v475
        %v481 = vmul.f32 %v480, 112.0
        %v482 = vsub.f32 %v479, %v481
        %v483 = vmax.f32 %v482, 0.0
        %v484 = vmul.f32 %v483, 0.0625
        %v485 = vadd.f32 %v484, 1e-05
        %v486 = vrsqrt.pop %v485
        %v487 = vmul.f32 %v476, %v486
        %v488 = vmul.f32 %v487, %v253
        %v489 = vadd.f32 %v488, %v258
        %v490 = vpack.c.bf16 %v489, %v489
        %491 = vmatprep.subr.bf16.mxu0 0
        %492 = vmatpush1.bf16.msra.mxu0 %v300
        %493 = vmatprep.subr.bf16.mxu0 0
        %494 = vmatpush1.bf16.msra.mxu0 %v299
        %495 = vmatprep.subr.bf16.mxu0 0
        %496 = vmatpush1.bf16.msra.mxu0 %v298
        %497 = vmatprep.subr.bf16.mxu0 0
        %498 = vmatpush1.bf16.msra.mxu0 %v297
        %499 = vmatprep.subr.bf16.mxu0 0
        %500 = vmatpush1.bf16.msra.mxu0 %v296
        %501 = vmatprep.subr.bf16.mxu0 0
        %502 = vmatpush1.bf16.msra.mxu0 %v295
        %503 = vmatprep.subr.bf16.mxu0 0
        %504 = vmatpush1.bf16.msra.mxu0 %v294
        %505 = vmatprep.subr.bf16.mxu0 0
        %506 = vmatpush1.bf16.msra.mxu0 %v293
        %507 = vmatprep.subr.bf16.mxu0 0
        %508 = vmatpush2.bf16.msra.mxu0 0
        %509 = vmatprep.subr.bf16.mxu0 0
        %510 = vmatpush2.bf16.msra.mxu0 0
        %511 = vmatprep.subr.bf16.mxu0 0
        %512 = vmatpush2.bf16.msra.mxu0 0
        %513 = vmatprep.subr.bf16.mxu0 0
        %514 = vmatpush2.bf16.msra.mxu0 0
        %515 = vmatprep.subr.bf16.mxu0 0
        %516 = vmatpush2.bf16.msra.mxu0 0
        %517 = vmatprep.subr.bf16.mxu0 0
        %518 = vmatpush2.bf16.msra.mxu0 0
        %519 = vmatprep.subr.bf16.mxu0 0
        %520 = vmatpush2.bf16.msra.mxu0 0
        %521 = vmatprep.subr.bf16.mxu0 0
        %522 = vmatpush2.bf16.msra.mxu0 0
        %523 = vmatprep.mubr.bf16.mxu0 0
        %524 = vmatmul.mubr.bf16.gmra.mxu0 %v490
        %v525 = vpop.f32.mrf.mxu0
        %v526 = vadd.f32 0.0, %v525
        %v527 = vpop.f32.mrf.mxu0
        %v528 = vpop.f32.mrf.mxu0
        %v529 = vpop.f32.mrf.mxu0
        %530 = vdwg.mxu0
        %v531 = vmax.f32 %v470, %v526
        %532 = vst [vmem:[%s214] sm:$0xff] %v531
        %s533 = sand.u32 %s97, 1
        %s534 = scalar_lea.sflag [#allocation4], %s533
        %s535 = sand.u32 %s97, 1
        %s536 = smul.addr %s535, 8
        %s537 = scalar_lea.vmem [#allocation8], %s536
        // Predicated region
        $region45: #{tpu_custom_call.1} parent=31 // pred_check
          %p538 = pneg %p107
        $region46: #{tpu_custom_call.1} parent=31 // pred_check_branch
          %540 = sbr.rel (%p538) target = $region48
        $region47: #{tpu_custom_call.1} parent=31 // pred_region
          %s542 = ssub.s32 128, 128
          %543 = vsyncadd %s534, %s542
          %s544 = smul.addr %s21, 128
          %s545 = scalar_lea.hbm %s3, %s544
          %s547 = sshll.u32 %s537, 4
          %s548 = int_to_ptr.vmem [resolvable:$true] %s547
          %550 = dma.vmem_to_hbm [thread:$0]  %s548, 128, %s545, %s534
        $region48: #{tpu_custom_call.1} parent=31 // pred_fallthru
          _
      $region32: #{tpu_custom_call.1} parent=5 // pred_fallthru
        _
      %p551 = scmp.le.s32.totalorder 2, %s16
      // Predicated region
      $region49: #{tpu_custom_call.1} parent=5 // pred_check
        %p552 = pneg %p551
      $region50: #{tpu_custom_call.1} parent=5 // pred_check_branch
        %554 = sbr.rel (%p552) target = $region52
      $region51: #{tpu_custom_call.1} parent=5 // pred_region
        %s555 = ssub.s32 %s16, 2
        // Predicated region
        $region53: #{tpu_custom_call.1} parent=51 // pred_check
          %p556 = pneg %p113
        $region54: #{tpu_custom_call.1} parent=51 // pred_check_branch
          %558 = sbr.rel (%p556) target = $region56
        $region55: #{tpu_custom_call.1} parent=51 // pred_region
          %s559 = sand.u32 %s98, 1
          %s560 = scalar_lea.sflag [#allocation4], %s559
          %s561 = sand.u32 %s98, 1
          %s562 = smul.addr %s561, 8
          %s563 = scalar_lea.vmem [#allocation8], %s562
          %564 = dma.done %s560, 128
        $region56: #{tpu_custom_call.1} parent=51 // pred_fallthru
          _
      $region52: #{tpu_custom_call.1} parent=5 // pred_fallthru
        _
    $region6: #{tpu_custom_call.1} parent=1 // loop_footer
      %s20 = sadd.s32 1, %s16
    $region7: #{tpu_custom_call.1} parent=1 // loop_footer_branch
      %15 = sbr.rel target = $region3
    $region8: #{tpu_custom_call.1} parent=1 // loop_exit
      _
    %565 = vsyncpa [#allocation3], 1
    %s566 = scalar_lea.sflag [#allocation3], 1
    %567 = vsyncpa %s566, 1
    %568 = vsyncpa [#allocation6], 1
    %569 = vsyncpa [#allocation4], 1
    %s570 = scalar_lea.sflag [#allocation4], 1
    %571 = vsyncpa %s570, 1

</llo_original>
